<compile_context>
chip_gen: v7x
topology: tpu7x:2x2x1
jax: 0.10.0
libtpu: 0.0.40
codegen_flags: <defaults>
</compile_context>

<pallas_src>
import functools

import numpy as np

import jax
import jax.numpy as jnp
from jax.experimental import pallas as pl
from jax.experimental.pallas import tpu as pltpu

EPS = 1e-5          # InstanceNorm eps
NEG_SLOPE = 0.01    # LeakyReLU negative slope


# --------------------------------------------------------------------------- #
# In-kernel helpers
# --------------------------------------------------------------------------- #
def _mac(wp, off, cout, cin, x):
    """1x1 conv on channels-first data via VPU broadcast-MACs.

    Weight columns live in the packed parameter slab `wp`:
    wp[0:cout, off+ci] is the weight column for input channel ci.
    x: (cin, L) -> (cout, L).  cin is tiny (4), cheaper on the VPU than an
    MXU push/pop round trip and keeps the vex slot free for the gather matmul.
    """
    acc = wp[0:cout, off:off + 1] * x[0:1, :]
    for ci in range(1, cin):
        acc = acc + wp[0:cout, off + ci:off + ci + 1] * x[ci:ci + 1, :]
    return acc


def _instance_norm(y, gamma, beta, *, act):
    """Per-channel InstanceNorm over the lane (pixel) axis, optional LeakyReLU.

    y: (C, L); gamma/beta: (C, 1).  One-pass statistics (sum, sum-of-squares),
    gamma folded into the scale so per-element work is one mul + one add.
    """
    inv_n = 1.0 / y.shape[-1]
    s1 = jnp.sum(y, axis=-1, keepdims=True)
    s2 = jnp.sum(y * y, axis=-1, keepdims=True)
    mean = s1 * inv_n
    var = jnp.maximum(s2 * inv_n - mean * mean, 0.0)        # biased var (IN)
    scale = jax.lax.rsqrt(var + EPS) * gamma                # (C, 1)
    shift = beta - mean * scale                             # (C, 1)
    out = y * scale + shift
    if act:
        out = jnp.maximum(out, NEG_SLOPE * out)             # LeakyReLU(0.01)
    return out


# --------------------------------------------------------------------------- #
# Fused BottleneckD kernel (all samples in one invocation)
# --------------------------------------------------------------------------- #
def _bottleneck_kernel(x_ref, s_ref, wp_ref, o_ref, *,
                       n, cin, cb, cout, kk, po, pool_taps,
                       w2_off, w1_off, w3_off, ws_off, gb_off):
    # x_ref : (n*cin, P) f32        s_ref : (P, pad(kk*po)) bf16
    # wp_ref: (rows, WP_COLS) f32   o_ref : (n*cout, po) f32
    wp = wp_ref[...]
    g1 = wp[0:cb, gb_off + 0:gb_off + 1]
    b1 = wp[0:cb, gb_off + 1:gb_off + 2]
    g2 = wp[0:cb, gb_off + 2:gb_off + 3]
    b2 = wp[0:cb, gb_off + 3:gb_off + 4]
    g3 = wp[0:cout, gb_off + 4:gb_off + 5]
    b3 = wp[0:cout, gb_off + 5:gb_off + 6]
    gs = wp[0:cout, gb_off + 6:gb_off + 7]
    bs = wp[0:cout, gb_off + 7:gb_off + 8]

    # conv1: 1x1 conv -> IN -> LeakyReLU per sample; stack [h1_n ; x_n] so the
    # gather matmul serves both the conv2 taps and the skip's avg-pool.
    lhs_rows = []
    for i in range(n):
        xn = x_ref[i * cin:(i + 1) * cin, :]                         # (cin, P)
        h1 = _instance_norm(_mac(wp, w1_off, cb, cin, xn), g1, b1, act=True)
        lhs_rows.append(h1)
        lhs_rows.append(xn)
    lhs = jnp.concatenate(lhs_rows, axis=0)                          # (n*(cb+cin), P)

    # Single wide-N bf16 gather matmul on the MXU (f32 accumulation).
    # S entries are exact 0/1 in bf16; only the LHS is rounded to bf16 here.
    g = jnp.dot(lhs.astype(jnp.bfloat16), s_ref[...],
                preferred_element_type=jnp.float32)                  # (n*(cb+cin), pad(kk*po))

    inv_pool = 1.0 / float(len(pool_taps))
    for i in range(n):
        r0 = i * (cb + cin)

        # conv2: per-tap channel mixing on the VPU, accumulated in f32.
        y2 = None
        for t in range(kk):
            pt = g[r0:r0 + cb, t * po:(t + 1) * po]                  # (cb, po)
            yt = _mac(wp, w2_off + t * cb, cb, cb, pt)
            y2 = yt if y2 is None else y2 + yt
        y2 = _instance_norm(y2, g2, b2, act=True)

        # skip: AvgPool(stride) == mean of the in-window conv taps of x,
        # then 1x1 conv + IN (no activation).
        xr = r0 + cb
        xs = None
        for t in pool_taps:
            xt = g[xr:xr + cin, t * po:(t + 1) * po]                 # (cin, po)
            xs = xt if xs is None else xs + xt
        xs = xs * inv_pool
        res = _instance_norm(_mac(wp, ws_off, cout, cin, xs), gs, bs, act=False)

        # conv3: 1x1 conv + IN (no act), residual add, final LeakyReLU.
        y3 = _instance_norm(_mac(wp, w3_off, cout, cb, y2), g3, b3, act=False)
        out = y3 + res
        # TODO(synk): stochastic depth / dropout / squeeze-excitation paths are
        # not instantiated in this config (p=0.0, dropout_op=None, SE=False).
        o_ref[i * cout:(i + 1) * cout, :] = jnp.maximum(out, NEG_SLOPE * out)


# --------------------------------------------------------------------------- #
# Host-side constant builder (static shapes -> built at trace time)
# --------------------------------------------------------------------------- #
def _round_up(x, m):
    return (x + m - 1) // m * m


def _build_selection(H, W, k, stride, pad):
    """bf16 0/1 selection matrix S[p, t*Po + p'] = 1 iff input pixel p is tap t
    of output pixel p' (zero column for zero-padded taps).  Columns padded to a
    multiple of 128 so the RHS is lane-dense."""
    Ho = (H + 2 * pad - k) // stride + 1
    Wo = (W + 2 * pad - k) // stride + 1
    Po = Ho * Wo
    ncols = _round_up(k * k * Po, 128)
    S = np.zeros((H * W, ncols), np.float32)
    for kh in range(k):
        for kw in range(k):
            t = kh * k + kw
            for oh in range(Ho):
                ih = oh * stride + kh - pad
                if not 0 <= ih < H:
                    continue
                for ow in range(Wo):
                    iw = ow * stride + kw - pad
                    if 0 <= iw < W:
                        S[ih * W + iw, t * Po + oh * Wo + ow] = 1.0
    return jnp.asarray(S, dtype=jnp.bfloat16), Ho, Wo


# --------------------------------------------------------------------------- #
# Forward wrapper
# --------------------------------------------------------------------------- #
@functools.partial(jax.jit, static_argnames=("k", "stride"))
def bottleneck_d_forward(x_nchw, params, *, k=3, stride=2):
    N, Cin, H, W = x_nchw.shape
    Cb = params["w1"].shape[0]
    Cout = params["w3"].shape[0]
    assert H % stride == 0 and W % stride == 0, "AvgPool(stride) needs divisible H, W"
    pad = (k - 1) // 2
    P = H * W
    kk = k * k

    S, Ho, Wo = _build_selection(H, W, k, stride, pad)
    assert (Ho, Wo) == (H // stride, W // stride)
    Po = Ho * Wo
    ncols = S.shape[1]

    # AvgPool(stride) reuses the conv taps whose offset (kh-pad, kw-pad) lies in
    # [0, stride) x [0, stride) -- valid because pad + stride <= k here.
    assert pad + stride <= k, "cannot derive AvgPool from conv taps for this (k, stride)"
    pool_taps = tuple(kh * k + kw
                      for kh in range(pad, pad + stride)
                      for kw in range(pad, pad + stride))

    # Pack all small weights + gamma/beta columns into ONE f32 operand.
    rows = max(Cb, Cout)

    def pad_rows(a):
        a = a.astype(jnp.float32)
        return jnp.pad(a, ((0, rows - a.shape[0]), (0, 0)))

    def col(name):
        v = params[name].astype(jnp.float32).reshape(-1, 1)
        return jnp.pad(v, ((0, rows - v.shape[0]), (0, 0)))

    # w2 columns: wp[:, t*Cb + ci] = w2[t, :, ci]
    w2_cols = params["w2"].transpose(1, 0, 2).reshape(Cb, kk * Cb)
    gb = jnp.concatenate([col("g1"), col("b1"), col("g2"), col("b2"),
                          col("g3"), col("b3"), col("gs"), col("bs")], axis=1)
    wpack = jnp.concatenate([pad_rows(w2_cols), pad_rows(params["w1"]),
                             pad_rows(params["w3"]), pad_rows(params["ws"]), gb],
                            axis=1)

    w2_off = 0
    w1_off = w2_off + kk * Cb
    w3_off = w1_off + Cin
    ws_off = w3_off + Cb
    gb_off = ws_off + Cin
    wp_cols = gb_off + 8
    assert wpack.shape == (rows, wp_cols)

    # NCHW -> channels-first flat pixels (samples folded into sublanes): only
    # a free reshape, no transpose.
    x = x_nchw.reshape(N * Cin, P).astype(jnp.float32)

    kernel = functools.partial(
        _bottleneck_kernel,
        n=N, cin=Cin, cb=Cb, cout=Cout, kk=kk, po=Po, pool_taps=pool_taps,
        w2_off=w2_off, w1_off=w1_off, w3_off=w3_off, ws_off=ws_off, gb_off=gb_off)

    out = pl.pallas_call(
        kernel,
        out_shape=jax.ShapeDtypeStruct((N * Cout, Po), jnp.float32),
        grid=(1,),                                   # single step: whole block fused
        in_specs=[
            pl.BlockSpec((N * Cin, P), lambda i: (0, 0)),      # x (all samples)
            pl.BlockSpec((P, ncols), lambda i: (0, 0)),        # bf16 tap selection
            pl.BlockSpec((rows, wp_cols), lambda i: (0, 0)),   # packed small params
        ],
        out_specs=pl.BlockSpec((N * Cout, Po), lambda i: (0, 0)),
        compiler_params=pltpu.CompilerParams(
            dimension_semantics=("arbitrary",)),
    )(x, S, wpack)

    return out.reshape(N, Cout, Ho, Wo)                         # NCHW out


# --------------------------------------------------------------------------- #
# Parameters (channels-first layouts, He-style init)
# --------------------------------------------------------------------------- #
def init_params(key, cin, cb, cout, k):
    # 1x1 convs stored as (Cout, Cin) -- same as squeezed PyTorch Conv2d weight.
    # 3x3 conv stored as (k*k, Cout, Cin), tap index t = kh*k + kw; from a
    # PyTorch (Cout, Cin, kh, kw) weight: w.transpose(2, 3, 0, 1).reshape(k*k, Cout, Cin).
    ks = jax.random.split(key, 12)

    def he(shape, fan_in, kk_):
        return jax.random.normal(kk_, shape, jnp.float32) * np.sqrt(2.0 / fan_in)

    return {
        "w1": he((cb, cin), cin, ks[0]),
        "g1": 1.0 + 0.1 * jax.random.normal(ks[1], (cb,), jnp.float32),
        "b1": 0.1 * jax.random.normal(ks[2], (cb,), jnp.float32),
        "w2": he((k * k, cb, cb), cb * k * k, ks[3]),
        "g2": 1.0 + 0.1 * jax.random.normal(ks[4], (cb,), jnp.float32),
        "b2": 0.1 * jax.random.normal(ks[5], (cb,), jnp.float32),
        "w3": he((cout, cb), cb, ks[6]),
        "g3": 1.0 + 0.1 * jax.random.normal(ks[7], (cout,), jnp.float32),
        "b3": 0.1 * jax.random.normal(ks[8], (cout,), jnp.float32),
        "ws": he((cout, cin), cin, ks[9]),
        "gs": 1.0 + 0.1 * jax.random.normal(ks[10], (cout,), jnp.float32),
        "bs": 0.1 * jax.random.normal(ks[11], (cout,), jnp.float32),
    }


# --------------------------------------------------------------------------- #
# Pure-JAX reference (independent path: lax.conv) for correctness checking
# --------------------------------------------------------------------------- #
def _reference_forward(x_nchw, params, *, k, stride):
    def inorm(y, gamma, beta):
        mean = jnp.mean(y, axis=(2, 3), keepdims=True)
        var = jnp.var(y, axis=(2, 3), keepdims=True)
        yh = (y - mean) * jax.lax.rsqrt(var + EPS)
        return yh * gamma.reshape(1, -1, 1, 1) + beta.reshape(1, -1, 1, 1)

    def lrelu(y):
        return jnp.where(y >= 0, y, NEG_SLOPE * y)

    def conv(y, w_oihw, st, pd):
        return jax.lax.conv_general_dilated(
            y, w_oihw, (st, st), [(pd, pd), (pd, pd)],
            dimension_numbers=("NCHW", "OIHW", "NCHW"),
            precision=jax.lax.Precision.HIGHEST)

    N, Cin, H, W = x_nchw.shape
    Cb = params["w1"].shape[0]
    w1 = params["w1"][:, :, None, None]
    w2 = jnp.transpose(params["w2"].reshape(k, k, Cb, Cb), (2, 3, 0, 1))
    w3 = params["w3"][:, :, None, None]
    ws = params["ws"][:, :, None, None]

    h1 = lrelu(inorm(conv(x_nchw, w1, 1, 0), params["g1"], params["b1"]))
    h2 = lrelu(inorm(conv(h1, w2, stride, (k - 1) // 2), params["g2"], params["b2"]))
    h3 = inorm(conv(h2, w3, 1, 0), params["g3"], params["b3"])

    xs = x_nchw.reshape(N, Cin, H // stride, stride, W // stride, stride).mean(axis=(3, 5))
    res = inorm(conv(xs, ws, 1, 0), params["gs"], params["bs"])
    return lrelu(h3 + res)


# --------------------------------------------------------------------------- #
if __name__ == "__main__":
    N, CIN, CB, COUT = 2, 4, 4, 8
    H = W = 16
    K, STRIDE = 3, 2

    key = jax.random.PRNGKey(0)
    kx, kp = jax.random.split(key)
    x = jax.random.normal(kx, (N, CIN, H, W), jnp.float32)        # NCHW input
    params = init_params(kp, CIN, CB, COUT, K)

    out = bottleneck_d_forward(x, params, k=K, stride=STRIDE)
    out = jax.block_until_ready(out)
    assert out.shape == (N, COUT, H // STRIDE, W // STRIDE), out.shape
    assert bool(jnp.all(jnp.isfinite(out)))

    ref = _reference_forward(x, params, k=K, stride=STRIDE)
    err = float(jnp.max(jnp.abs(out - ref)))
    # Only h1 / x are rounded to bf16 (for the MXU gather matmul; S is exact in
    # bf16, accumulation and all other math are f32), so tolerate ~bf16 eps of
    # relative error on O(1) InstanceNorm'd activations.
    assert err < 3e-2, f"max abs error vs reference: {err}"
    print("KERNEL_OK")
</pallas_src>

<mosaic_0001>
module attributes {stable_mosaic.version = 11 : i64} {
  func.func @_bottleneck_kernel(%arg0: i32, %arg1: memref<8x256xf32, #tpu.memory_space<vmem>>, %arg2: memref<256x640xbf16, #tpu.memory_space<vmem>>, %arg3: memref<8x56xf32, #tpu.memory_space<vmem>>, %arg4: memref<16x64xf32, #tpu.memory_space<vmem>>) attributes {dimension_semantics = [#tpu.dimension_semantics<arbitrary>], iteration_bounds = array<i64: 1>, scalar_prefetch = 0 : i64, scratch_operands = 0 : i64, tpu.core_type = #tpu.core_type<tc>, window_params = [{pipeline_mode = #tpu.pipeline_mode<synchronous>, transform_indices = @transform_0, window_bounds = array<i64: 8, 256>}, {pipeline_mode = #tpu.pipeline_mode<synchronous>, transform_indices = @transform_1, window_bounds = array<i64: 256, 640>}, {pipeline_mode = #tpu.pipeline_mode<synchronous>, transform_indices = @transform_2, window_bounds = array<i64: 8, 56>}, {pipeline_mode = #tpu.pipeline_mode<synchronous>, transform_indices = @transform_3, window_bounds = array<i64: 16, 64>}]} {
    %c0 = arith.constant 0 : index
    %c0_0 = arith.constant 0 : index
    %0 = vector.load %arg3[%c0, %c0_0] : memref<8x56xf32, #tpu.memory_space<vmem>>, vector<8x56xf32>
    %1 = vector.extract_strided_slice %0 {offsets = [0, 48], sizes = [4, 1], strides = [1, 1]} : vector<8x56xf32> to vector<4x1xf32>
    %2 = vector.extract_strided_slice %0 {offsets = [0, 49], sizes = [4, 1], strides = [1, 1]} : vector<8x56xf32> to vector<4x1xf32>
    %3 = vector.extract_strided_slice %0 {offsets = [0, 50], sizes = [4, 1], strides = [1, 1]} : vector<8x56xf32> to vector<4x1xf32>
    %4 = vector.extract_strided_slice %0 {offsets = [0, 51], sizes = [4, 1], strides = [1, 1]} : vector<8x56xf32> to vector<4x1xf32>
    %5 = vector.extract_strided_slice %0 {offsets = [0, 52], sizes = [8, 1], strides = [1, 1]} : vector<8x56xf32> to vector<8x1xf32>
    %6 = vector.extract_strided_slice %0 {offsets = [0, 53], sizes = [8, 1], strides = [1, 1]} : vector<8x56xf32> to vector<8x1xf32>
    %7 = vector.extract_strided_slice %0 {offsets = [0, 54], sizes = [8, 1], strides = [1, 1]} : vector<8x56xf32> to vector<8x1xf32>
    %8 = vector.extract_strided_slice %0 {offsets = [0, 55], sizes = [8, 1], strides = [1, 1]} : vector<8x56xf32> to vector<8x1xf32>
    %c0_1 = arith.constant 0 : index
    %c0_2 = arith.constant 0 : index
    %9 = vector.load %arg1[%c0_1, %c0_2] : memref<8x256xf32, #tpu.memory_space<vmem>>, vector<4x256xf32>
    %10 = vector.extract_strided_slice %0 {offsets = [0, 36], sizes = [4, 1], strides = [1, 1]} : vector<8x56xf32> to vector<4x1xf32>
    %11 = vector.extract_strided_slice %9 {offsets = [0, 0], sizes = [1, 256], strides = [1, 1]} : vector<4x256xf32> to vector<1x256xf32>
    %12 = vector.broadcast %10 : vector<4x1xf32> to vector<4x256xf32>
    %13 = vector.broadcast %11 : vector<1x256xf32> to vector<4x256xf32>
    %14 = arith.mulf %12, %13 : vector<4x256xf32>
    %15 = vector.extract_strided_slice %0 {offsets = [0, 37], sizes = [4, 1], strides = [1, 1]} : vector<8x56xf32> to vector<4x1xf32>
    %16 = vector.extract_strided_slice %9 {offsets = [1, 0], sizes = [1, 256], strides = [1, 1]} : vector<4x256xf32> to vector<1x256xf32>
    %17 = vector.broadcast %15 : vector<4x1xf32> to vector<4x256xf32>
    %18 = vector.broadcast %16 : vector<1x256xf32> to vector<4x256xf32>
    %19 = arith.mulf %17, %18 : vector<4x256xf32>
    %20 = arith.addf %14, %19 : vector<4x256xf32>
    %21 = vector.extract_strided_slice %0 {offsets = [0, 38], sizes = [4, 1], strides = [1, 1]} : vector<8x56xf32> to vector<4x1xf32>
    %22 = vector.extract_strided_slice %9 {offsets = [2, 0], sizes = [1, 256], strides = [1, 1]} : vector<4x256xf32> to vector<1x256xf32>
    %23 = vector.broadcast %21 : vector<4x1xf32> to vector<4x256xf32>
    %24 = vector.broadcast %22 : vector<1x256xf32> to vector<4x256xf32>
    %25 = arith.mulf %23, %24 : vector<4x256xf32>
    %26 = arith.addf %20, %25 : vector<4x256xf32>
    %27 = vector.extract_strided_slice %0 {offsets = [0, 39], sizes = [4, 1], strides = [1, 1]} : vector<8x56xf32> to vector<4x1xf32>
    %28 = vector.extract_strided_slice %9 {offsets = [3, 0], sizes = [1, 256], strides = [1, 1]} : vector<4x256xf32> to vector<1x256xf32>
    %29 = vector.broadcast %27 : vector<4x1xf32> to vector<4x256xf32>
    %30 = vector.broadcast %28 : vector<1x256xf32> to vector<4x256xf32>
    %31 = arith.mulf %29, %30 : vector<4x256xf32>
    %32 = arith.addf %26, %31 : vector<4x256xf32>
    %cst = arith.constant dense<0.000000e+00> : vector<4xf32>
    %33 = vector.multi_reduction <add>, %32, %cst [1] : vector<4x256xf32> to vector<4xf32>
    %34 = vector.shape_cast %33 : vector<4xf32> to vector<4x1xf32>
    %35 = arith.mulf %32, %32 : vector<4x256xf32>
    %cst_3 = arith.constant dense<0.000000e+00> : vector<4xf32>
    %36 = vector.multi_reduction <add>, %35, %cst_3 [1] : vector<4x256xf32> to vector<4xf32>
    %37 = vector.shape_cast %36 : vector<4xf32> to vector<4x1xf32>
    %cst_4 = arith.constant 3.906250e-03 : f32
    %38 = vector.broadcast %cst_4 : f32 to vector<4x1xf32>
    %39 = arith.mulf %34, %38 : vector<4x1xf32>
    %cst_5 = arith.constant 3.906250e-03 : f32
    %40 = vector.broadcast %cst_5 : f32 to vector<4x1xf32>
    %41 = arith.mulf %37, %40 : vector<4x1xf32>
    %42 = arith.mulf %39, %39 : vector<4x1xf32>
    %43 = arith.subf %41, %42 : vector<4x1xf32>
    %cst_6 = arith.constant 0.000000e+00 : f32
    %44 = vector.broadcast %cst_6 : f32 to vector<4x1xf32>
    %45 = arith.maximumf %43, %44 : vector<4x1xf32>
    %cst_7 = arith.constant 9.99999974E-6 : f32
    %46 = vector.broadcast %cst_7 : f32 to vector<4x1xf32>
    %47 = arith.addf %45, %46 : vector<4x1xf32>
    %48 = math.rsqrt %47 : vector<4x1xf32>
    %49 = arith.mulf %48, %1 : vector<4x1xf32>
    %50 = arith.mulf %39, %49 : vector<4x1xf32>
    %51 = arith.subf %2, %50 : vector<4x1xf32>
    %52 = vector.broadcast %49 : vector<4x1xf32> to vector<4x256xf32>
    %53 = arith.mulf %32, %52 : vector<4x256xf32>
    %54 = vector.broadcast %51 : vector<4x1xf32> to vector<4x256xf32>
    %55 = arith.addf %53, %54 : vector<4x256xf32>
    %cst_8 = arith.constant 0.00999999977 : f32
    %56 = vector.broadcast %cst_8 : f32 to vector<4x256xf32>
    %57 = arith.mulf %56, %55 : vector<4x256xf32>
    %58 = arith.maximumf %55, %57 : vector<4x256xf32>
    %c4 = arith.constant 4 : index
    %c0_9 = arith.constant 0 : index
    %59 = vector.load %arg1[%c4, %c0_9] : memref<8x256xf32, #tpu.memory_space<vmem>>, vector<4x256xf32>
    %60 = vector.extract_strided_slice %0 {offsets = [0, 36], sizes = [4, 1], strides = [1, 1]} : vector<8x56xf32> to vector<4x1xf32>
    %61 = vector.extract_strided_slice %59 {offsets = [0, 0], sizes = [1, 256], strides = [1, 1]} : vector<4x256xf32> to vector<1x256xf32>
    %62 = vector.broadcast %60 : vector<4x1xf32> to vector<4x256xf32>
    %63 = vector.broadcast %61 : vector<1x256xf32> to vector<4x256xf32>
    %64 = arith.mulf %62, %63 : vector<4x256xf32>
    %65 = vector.extract_strided_slice %0 {offsets = [0, 37], sizes = [4, 1], strides = [1, 1]} : vector<8x56xf32> to vector<4x1xf32>
    %66 = vector.extract_strided_slice %59 {offsets = [1, 0], sizes = [1, 256], strides = [1, 1]} : vector<4x256xf32> to vector<1x256xf32>
    %67 = vector.broadcast %65 : vector<4x1xf32> to vector<4x256xf32>
    %68 = vector.broadcast %66 : vector<1x256xf32> to vector<4x256xf32>
    %69 = arith.mulf %67, %68 : vector<4x256xf32>
    %70 = arith.addf %64, %69 : vector<4x256xf32>
    %71 = vector.extract_strided_slice %0 {offsets = [0, 38], sizes = [4, 1], strides = [1, 1]} : vector<8x56xf32> to vector<4x1xf32>
    %72 = vector.extract_strided_slice %59 {offsets = [2, 0], sizes = [1, 256], strides = [1, 1]} : vector<4x256xf32> to vector<1x256xf32>
    %73 = vector.broadcast %71 : vector<4x1xf32> to vector<4x256xf32>
    %74 = vector.broadcast %72 : vector<1x256xf32> to vector<4x256xf32>
    %75 = arith.mulf %73, %74 : vector<4x256xf32>
    %76 = arith.addf %70, %75 : vector<4x256xf32>
    %77 = vector.extract_strided_slice %0 {offsets = [0, 39], sizes = [4, 1], strides = [1, 1]} : vector<8x56xf32> to vector<4x1xf32>
    %78 = vector.extract_strided_slice %59 {offsets = [3, 0], sizes = [1, 256], strides = [1, 1]} : vector<4x256xf32> to vector<1x256xf32>
    %79 = vector.broadcast %77 : vector<4x1xf32> to vector<4x256xf32>
    %80 = vector.broadcast %78 : vector<1x256xf32> to vector<4x256xf32>
    %81 = arith.mulf %79, %80 : vector<4x256xf32>
    %82 = arith.addf %76, %81 : vector<4x256xf32>
    %cst_10 = arith.constant dense<0.000000e+00> : vector<4xf32>
    %83 = vector.multi_reduction <add>, %82, %cst_10 [1] : vector<4x256xf32> to vector<4xf32>
    %84 = vector.shape_cast %83 : vector<4xf32> to vector<4x1xf32>
    %85 = arith.mulf %82, %82 : vector<4x256xf32>
    %cst_11 = arith.constant dense<0.000000e+00> : vector<4xf32>
    %86 = vector.multi_reduction <add>, %85, %cst_11 [1] : vector<4x256xf32> to vector<4xf32>
    %87 = vector.shape_cast %86 : vector<4xf32> to vector<4x1xf32>
    %cst_12 = arith.constant 3.906250e-03 : f32
    %88 = vector.broadcast %cst_12 : f32 to vector<4x1xf32>
    %89 = arith.mulf %84, %88 : vector<4x1xf32>
    %cst_13 = arith.constant 3.906250e-03 : f32
    %90 = vector.broadcast %cst_13 : f32 to vector<4x1xf32>
    %91 = arith.mulf %87, %90 : vector<4x1xf32>
    %92 = arith.mulf %89, %89 : vector<4x1xf32>
    %93 = arith.subf %91, %92 : vector<4x1xf32>
    %cst_14 = arith.constant 0.000000e+00 : f32
    %94 = vector.broadcast %cst_14 : f32 to vector<4x1xf32>
    %95 = arith.maximumf %93, %94 : vector<4x1xf32>
    %cst_15 = arith.constant 9.99999974E-6 : f32
    %96 = vector.broadcast %cst_15 : f32 to vector<4x1xf32>
    %97 = arith.addf %95, %96 : vector<4x1xf32>
    %98 = math.rsqrt %97 : vector<4x1xf32>
    %99 = arith.mulf %98, %1 : vector<4x1xf32>
    %100 = arith.mulf %89, %99 : vector<4x1xf32>
    %101 = arith.subf %2, %100 : vector<4x1xf32>
    %102 = vector.broadcast %99 : vector<4x1xf32> to vector<4x256xf32>
    %103 = arith.mulf %82, %102 : vector<4x256xf32>
    %104 = vector.broadcast %101 : vector<4x1xf32> to vector<4x256xf32>
    %105 = arith.addf %103, %104 : vector<4x256xf32>
    %cst_16 = arith.constant 0.00999999977 : f32
    %106 = vector.broadcast %cst_16 : f32 to vector<4x256xf32>
    %107 = arith.mulf %106, %105 : vector<4x256xf32>
    %108 = arith.maximumf %105, %107 : vector<4x256xf32>
    %109 = tpu.concatenate %58, %9, %108, %59 in 0 : vector<4x256xf32>, vector<4x256xf32>, vector<4x256xf32>, vector<4x256xf32> -> vector<16x256xf32>
    %110 = arith.truncf %109 : vector<16x256xf32> to vector<16x256xbf16>
    %c0_17 = arith.constant 0 : index
    %c0_18 = arith.constant 0 : index
    %111 = vector.load %arg2[%c0_17, %c0_18] : memref<256x640xbf16, #tpu.memory_space<vmem>>, vector<256x640xbf16>
    %cst_19 = arith.constant dense<0.000000e+00> : vector<16x640xf32>
    %112 = tpu.matmul %110, %111, %cst_19 {dimension_numbers = #tpu.dot_dimension_numbers<[1], [0], [0], [1], [0, 0, 1, 1], [], []>} : vector<16x256xbf16>, vector<256x640xbf16>, vector<16x640xf32> -> vector<16x640xf32>
    %113 = vector.extract_strided_slice %112 {offsets = [0, 0], sizes = [4, 64], strides = [1, 1]} : vector<16x640xf32> to vector<4x64xf32>
    %114 = vector.extract_strided_slice %0 {offsets = [0, 0], sizes = [4, 1], strides = [1, 1]} : vector<8x56xf32> to vector<4x1xf32>
    %115 = vector.extract_strided_slice %113 {offsets = [0, 0], sizes = [1, 64], strides = [1, 1]} : vector<4x64xf32> to vector<1x64xf32>
    %116 = vector.broadcast %114 : vector<4x1xf32> to vector<4x64xf32>
    %117 = vector.broadcast %115 : vector<1x64xf32> to vector<4x64xf32>
    %118 = arith.mulf %116, %117 : vector<4x64xf32>
    %119 = vector.extract_strided_slice %0 {offsets = [0, 1], sizes = [4, 1], strides = [1, 1]} : vector<8x56xf32> to vector<4x1xf32>
    %120 = vector.extract_strided_slice %113 {offsets = [1, 0], sizes = [1, 64], strides = [1, 1]} : vector<4x64xf32> to vector<1x64xf32>
    %121 = vector.broadcast %119 : vector<4x1xf32> to vector<4x64xf32>
    %122 = vector.broadcast %120 : vector<1x64xf32> to vector<4x64xf32>
    %123 = arith.mulf %121, %122 : vector<4x64xf32>
    %124 = arith.addf %118, %123 : vector<4x64xf32>
    %125 = vector.extract_strided_slice %0 {offsets = [0, 2], sizes = [4, 1], strides = [1, 1]} : vector<8x56xf32> to vector<4x1xf32>
    %126 = vector.extract_strided_slice %113 {offsets = [2, 0], sizes = [1, 64], strides = [1, 1]} : vector<4x64xf32> to vector<1x64xf32>
    %127 = vector.broadcast %125 : vector<4x1xf32> to vector<4x64xf32>
    %128 = vector.broadcast %126 : vector<1x64xf32> to vector<4x64xf32>
    %129 = arith.mulf %127, %128 : vector<4x64xf32>
    %130 = arith.addf %124, %129 : vector<4x64xf32>
    %131 = vector.extract_strided_slice %0 {offsets = [0, 3], sizes = [4, 1], strides = [1, 1]} : vector<8x56xf32> to vector<4x1xf32>
    %132 = vector.extract_strided_slice %113 {offsets = [3, 0], sizes = [1, 64], strides = [1, 1]} : vector<4x64xf32> to vector<1x64xf32>
    %133 = vector.broadcast %131 : vector<4x1xf32> to vector<4x64xf32>
    %134 = vector.broadcast %132 : vector<1x64xf32> to vector<4x64xf32>
    %135 = arith.mulf %133, %134 : vector<4x64xf32>
    %136 = arith.addf %130, %135 : vector<4x64xf32>
    %137 = vector.extract_strided_slice %112 {offsets = [0, 64], sizes = [4, 64], strides = [1, 1]} : vector<16x640xf32> to vector<4x64xf32>
    %138 = vector.extract_strided_slice %0 {offsets = [0, 4], sizes = [4, 1], strides = [1, 1]} : vector<8x56xf32> to vector<4x1xf32>
    %139 = vector.extract_strided_slice %137 {offsets = [0, 0], sizes = [1, 64], strides = [1, 1]} : vector<4x64xf32> to vector<1x64xf32>
    %140 = vector.broadcast %138 : vector<4x1xf32> to vector<4x64xf32>
    %141 = vector.broadcast %139 : vector<1x64xf32> to vector<4x64xf32>
    %142 = arith.mulf %140, %141 : vector<4x64xf32>
    %143 = vector.extract_strided_slice %0 {offsets = [0, 5], sizes = [4, 1], strides = [1, 1]} : vector<8x56xf32> to vector<4x1xf32>
    %144 = vector.extract_strided_slice %137 {offsets = [1, 0], sizes = [1, 64], strides = [1, 1]} : vector<4x64xf32> to vector<1x64xf32>
    %145 = vector.broadcast %143 : vector<4x1xf32> to vector<4x64xf32>
    %146 = vector.broadcast %144 : vector<1x64xf32> to vector<4x64xf32>
    %147 = arith.mulf %145, %146 : vector<4x64xf32>
    %148 = arith.addf %142, %147 : vector<4x64xf32>
    %149 = vector.extract_strided_slice %0 {offsets = [0, 6], sizes = [4, 1], strides = [1, 1]} : vector<8x56xf32> to vector<4x1xf32>
    %150 = vector.extract_strided_slice %137 {offsets = [2, 0], sizes = [1, 64], strides = [1, 1]} : vector<4x64xf32> to vector<1x64xf32>
    %151 = vector.broadcast %149 : vector<4x1xf32> to vector<4x64xf32>
    %152 = vector.broadcast %150 : vector<1x64xf32> to vector<4x64xf32>
    %153 = arith.mulf %151, %152 : vector<4x64xf32>
    %154 = arith.addf %148, %153 : vector<4x64xf32>
    %155 = vector.extract_strided_slice %0 {offsets = [0, 7], sizes = [4, 1], strides = [1, 1]} : vector<8x56xf32> to vector<4x1xf32>
    %156 = vector.extract_strided_slice %137 {offsets = [3, 0], sizes = [1, 64], strides = [1, 1]} : vector<4x64xf32> to vector<1x64xf32>
    %157 = vector.broadcast %155 : vector<4x1xf32> to vector<4x64xf32>
    %158 = vector.broadcast %156 : vector<1x64xf32> to vector<4x64xf32>
    %159 = arith.mulf %157, %158 : vector<4x64xf32>
    %160 = arith.addf %154, %159 : vector<4x64xf32>
    %161 = arith.addf %136, %160 : vector<4x64xf32>
    %162 = vector.extract_strided_slice %112 {offsets = [0, 128], sizes = [4, 64], strides = [1, 1]} : vector<16x640xf32> to vector<4x64xf32>
    %163 = vector.extract_strided_slice %0 {offsets = [0, 8], sizes = [4, 1], strides = [1, 1]} : vector<8x56xf32> to vector<4x1xf32>
    %164 = vector.extract_strided_slice %162 {offsets = [0, 0], sizes = [1, 64], strides = [1, 1]} : vector<4x64xf32> to vector<1x64xf32>
    %165 = vector.broadcast %163 : vector<4x1xf32> to vector<4x64xf32>
    %166 = vector.broadcast %164 : vector<1x64xf32> to vector<4x64xf32>
    %167 = arith.mulf %165, %166 : vector<4x64xf32>
    %168 = vector.extract_strided_slice %0 {offsets = [0, 9], sizes = [4, 1], strides = [1, 1]} : vector<8x56xf32> to vector<4x1xf32>
    %169 = vector.extract_strided_slice %162 {offsets = [1, 0], sizes = [1, 64], strides = [1, 1]} : vector<4x64xf32> to vector<1x64xf32>
    %170 = vector.broadcast %168 : vector<4x1xf32> to vector<4x64xf32>
    %171 = vector.broadcast %169 : vector<1x64xf32> to vector<4x64xf32>
    %172 = arith.mulf %170, %171 : vector<4x64xf32>
    %173 = arith.addf %167, %172 : vector<4x64xf32>
    %174 = vector.extract_strided_slice %0 {offsets = [0, 10], sizes = [4, 1], strides = [1, 1]} : vector<8x56xf32> to vector<4x1xf32>
    %175 = vector.extract_strided_slice %162 {offsets = [2, 0], sizes = [1, 64], strides = [1, 1]} : vector<4x64xf32> to vector<1x64xf32>
    %176 = vector.broadcast %174 : vector<4x1xf32> to vector<4x64xf32>
    %177 = vector.broadcast %175 : vector<1x64xf32> to vector<4x64xf32>
    %178 = arith.mulf %176, %177 : vector<4x64xf32>
    %179 = arith.addf %173, %178 : vector<4x64xf32>
    %180 = vector.extract_strided_slice %0 {offsets = [0, 11], sizes = [4, 1], strides = [1, 1]} : vector<8x56xf32> to vector<4x1xf32>
    %181 = vector.extract_strided_slice %162 {offsets = [3, 0], sizes = [1, 64], strides = [1, 1]} : vector<4x64xf32> to vector<1x64xf32>
    %182 = vector.broadcast %180 : vector<4x1xf32> to vector<4x64xf32>
    %183 = vector.broadcast %181 : vector<1x64xf32> to vector<4x64xf32>
    %184 = arith.mulf %182, %183 : vector<4x64xf32>
    %185 = arith.addf %179, %184 : vector<4x64xf32>
    %186 = arith.addf %161, %185 : vector<4x64xf32>
    %187 = vector.extract_strided_slice %112 {offsets = [0, 192], sizes = [4, 64], strides = [1, 1]} : vector<16x640xf32> to vector<4x64xf32>
    %188 = vector.extract_strided_slice %0 {offsets = [0, 12], sizes = [4, 1], strides = [1, 1]} : vector<8x56xf32> to vector<4x1xf32>
    %189 = vector.extract_strided_slice %187 {offsets = [0, 0], sizes = [1, 64], strides = [1, 1]} : vector<4x64xf32> to vector<1x64xf32>
    %190 = vector.broadcast %188 : vector<4x1xf32> to vector<4x64xf32>
    %191 = vector.broadcast %189 : vector<1x64xf32> to vector<4x64xf32>
    %192 = arith.mulf %190, %191 : vector<4x64xf32>
    %193 = vector.extract_strided_slice %0 {offsets = [0, 13], sizes = [4, 1], strides = [1, 1]} : vector<8x56xf32> to vector<4x1xf32>
    %194 = vector.extract_strided_slice %187 {offsets = [1, 0], sizes = [1, 64], strides = [1, 1]} : vector<4x64xf32> to vector<1x64xf32>
    %195 = vector.broadcast %193 : vector<4x1xf32> to vector<4x64xf32>
    %196 = vector.broadcast %194 : vector<1x64xf32> to vector<4x64xf32>
    %197 = arith.mulf %195, %196 : vector<4x64xf32>
    %198 = arith.addf %192, %197 : vector<4x64xf32>
    %199 = vector.extract_strided_slice %0 {offsets = [0, 14], sizes = [4, 1], strides = [1, 1]} : vector<8x56xf32> to vector<4x1xf32>
    %200 = vector.extract_strided_slice %187 {offsets = [2, 0], sizes = [1, 64], strides = [1, 1]} : vector<4x64xf32> to vector<1x64xf32>
    %201 = vector.broadcast %199 : vector<4x1xf32> to vector<4x64xf32>
    %202 = vector.broadcast %200 : vector<1x64xf32> to vector<4x64xf32>
    %203 = arith.mulf %201, %202 : vector<4x64xf32>
    %204 = arith.addf %198, %203 : vector<4x64xf32>
    %205 = vector.extract_strided_slice %0 {offsets = [0, 15], sizes = [4, 1], strides = [1, 1]} : vector<8x56xf32> to vector<4x1xf32>
    %206 = vector.extract_strided_slice %187 {offsets = [3, 0], sizes = [1, 64], strides = [1, 1]} : vector<4x64xf32> to vector<1x64xf32>
    %207 = vector.broadcast %205 : vector<4x1xf32> to vector<4x64xf32>
    %208 = vector.broadcast %206 : vector<1x64xf32> to vector<4x64xf32>
    %209 = arith.mulf %207, %208 : vector<4x64xf32>
    %210 = arith.addf %204, %209 : vector<4x64xf32>
    %211 = arith.addf %186, %210 : vector<4x64xf32>
    %212 = vector.extract_strided_slice %112 {offsets = [0, 256], sizes = [4, 64], strides = [1, 1]} : vector<16x640xf32> to vector<4x64xf32>
    %213 = vector.extract_strided_slice %0 {offsets = [0, 16], sizes = [4, 1], strides = [1, 1]} : vector<8x56xf32> to vector<4x1xf32>
    %214 = vector.extract_strided_slice %212 {offsets = [0, 0], sizes = [1, 64], strides = [1, 1]} : vector<4x64xf32> to vector<1x64xf32>
    %215 = vector.broadcast %213 : vector<4x1xf32> to vector<4x64xf32>
    %216 = vector.broadcast %214 : vector<1x64xf32> to vector<4x64xf32>
    %217 = arith.mulf %215, %216 : vector<4x64xf32>
    %218 = vector.extract_strided_slice %0 {offsets = [0, 17], sizes = [4, 1], strides = [1, 1]} : vector<8x56xf32> to vector<4x1xf32>
    %219 = vector.extract_strided_slice %212 {offsets = [1, 0], sizes = [1, 64], strides = [1, 1]} : vector<4x64xf32> to vector<1x64xf32>
    %220 = vector.broadcast %218 : vector<4x1xf32> to vector<4x64xf32>
    %221 = vector.broadcast %219 : vector<1x64xf32> to vector<4x64xf32>
    %222 = arith.mulf %220, %221 : vector<4x64xf32>
    %223 = arith.addf %217, %222 : vector<4x64xf32>
    %224 = vector.extract_strided_slice %0 {offsets = [0, 18], sizes = [4, 1], strides = [1, 1]} : vector<8x56xf32> to vector<4x1xf32>
    %225 = vector.extract_strided_slice %212 {offsets = [2, 0], sizes = [1, 64], strides = [1, 1]} : vector<4x64xf32> to vector<1x64xf32>
    %226 = vector.broadcast %224 : vector<4x1xf32> to vector<4x64xf32>
    %227 = vector.broadcast %225 : vector<1x64xf32> to vector<4x64xf32>
    %228 = arith.mulf %226, %227 : vector<4x64xf32>
    %229 = arith.addf %223, %228 : vector<4x64xf32>
    %230 = vector.extract_strided_slice %0 {offsets = [0, 19], sizes = [4, 1], strides = [1, 1]} : vector<8x56xf32> to vector<4x1xf32>
    %231 = vector.extract_strided_slice %212 {offsets = [3, 0], sizes = [1, 64], strides = [1, 1]} : vector<4x64xf32> to vector<1x64xf32>
    %232 = vector.broadcast %230 : vector<4x1xf32> to vector<4x64xf32>
    %233 = vector.broadcast %231 : vector<1x64xf32> to vector<4x64xf32>
    %234 = arith.mulf %232, %233 : vector<4x64xf32>
    %235 = arith.addf %229, %234 : vector<4x64xf32>
    %236 = arith.addf %211, %235 : vector<4x64xf32>
    %237 = vector.extract_strided_slice %112 {offsets = [0, 320], sizes = [4, 64], strides = [1, 1]} : vector<16x640xf32> to vector<4x64xf32>
    %238 = vector.extract_strided_slice %0 {offsets = [0, 20], sizes = [4, 1], strides = [1, 1]} : vector<8x56xf32> to vector<4x1xf32>
    %239 = vector.extract_strided_slice %237 {offsets = [0, 0], sizes = [1, 64], strides = [1, 1]} : vector<4x64xf32> to vector<1x64xf32>
    %240 = vector.broadcast %238 : vector<4x1xf32> to vector<4x64xf32>
    %241 = vector.broadcast %239 : vector<1x64xf32> to vector<4x64xf32>
    %242 = arith.mulf %240, %241 : vector<4x64xf32>
    %243 = vector.extract_strided_slice %0 {offsets = [0, 21], sizes = [4, 1], strides = [1, 1]} : vector<8x56xf32> to vector<4x1xf32>
    %244 = vector.extract_strided_slice %237 {offsets = [1, 0], sizes = [1, 64], strides = [1, 1]} : vector<4x64xf32> to vector<1x64xf32>
    %245 = vector.broadcast %243 : vector<4x1xf32> to vector<4x64xf32>
    %246 = vector.broadcast %244 : vector<1x64xf32> to vector<4x64xf32>
    %247 = arith.mulf %245, %246 : vector<4x64xf32>
    %248 = arith.addf %242, %247 : vector<4x64xf32>
    %249 = vector.extract_strided_slice %0 {offsets = [0, 22], sizes = [4, 1], strides = [1, 1]} : vector<8x56xf32> to vector<4x1xf32>
    %250 = vector.extract_strided_slice %237 {offsets = [2, 0], sizes = [1, 64], strides = [1, 1]} : vector<4x64xf32> to vector<1x64xf32>
    %251 = vector.broadcast %249 : vector<4x1xf32> to vector<4x64xf32>
    %252 = vector.broadcast %250 : vector<1x64xf32> to vector<4x64xf32>
    %253 = arith.mulf %251, %252 : vector<4x64xf32>
    %254 = arith.addf %248, %253 : vector<4x64xf32>
    %255 = vector.extract_strided_slice %0 {offsets = [0, 23], sizes = [4, 1], strides = [1, 1]} : vector<8x56xf32> to vector<4x1xf32>
    %256 = vector.extract_strided_slice %237 {offsets = [3, 0], sizes = [1, 64], strides = [1, 1]} : vector<4x64xf32> to vector<1x64xf32>
    %257 = vector.broadcast %255 : vector<4x1xf32> to vector<4x64xf32>
    %258 = vector.broadcast %256 : vector<1x64xf32> to vector<4x64xf32>
    %259 = arith.mulf %257, %258 : vector<4x64xf32>
    %260 = arith.addf %254, %259 : vector<4x64xf32>
    %261 = arith.addf %236, %260 : vector<4x64xf32>
    %262 = vector.extract_strided_slice %112 {offsets = [0, 384], sizes = [4, 64], strides = [1, 1]} : vector<16x640xf32> to vector<4x64xf32>
    %263 = vector.extract_strided_slice %0 {offsets = [0, 24], sizes = [4, 1], strides = [1, 1]} : vector<8x56xf32> to vector<4x1xf32>
    %264 = vector.extract_strided_slice %262 {offsets = [0, 0], sizes = [1, 64], strides = [1, 1]} : vector<4x64xf32> to vector<1x64xf32>
    %265 = vector.broadcast %263 : vector<4x1xf32> to vector<4x64xf32>
    %266 = vector.broadcast %264 : vector<1x64xf32> to vector<4x64xf32>
    %267 = arith.mulf %265, %266 : vector<4x64xf32>
    %268 = vector.extract_strided_slice %0 {offsets = [0, 25], sizes = [4, 1], strides = [1, 1]} : vector<8x56xf32> to vector<4x1xf32>
    %269 = vector.extract_strided_slice %262 {offsets = [1, 0], sizes = [1, 64], strides = [1, 1]} : vector<4x64xf32> to vector<1x64xf32>
    %270 = vector.broadcast %268 : vector<4x1xf32> to vector<4x64xf32>
    %271 = vector.broadcast %269 : vector<1x64xf32> to vector<4x64xf32>
    %272 = arith.mulf %270, %271 : vector<4x64xf32>
    %273 = arith.addf %267, %272 : vector<4x64xf32>
    %274 = vector.extract_strided_slice %0 {offsets = [0, 26], sizes = [4, 1], strides = [1, 1]} : vector<8x56xf32> to vector<4x1xf32>
    %275 = vector.extract_strided_slice %262 {offsets = [2, 0], sizes = [1, 64], strides = [1, 1]} : vector<4x64xf32> to vector<1x64xf32>
    %276 = vector.broadcast %274 : vector<4x1xf32> to vector<4x64xf32>
    %277 = vector.broadcast %275 : vector<1x64xf32> to vector<4x64xf32>
    %278 = arith.mulf %276, %277 : vector<4x64xf32>
    %279 = arith.addf %273, %278 : vector<4x64xf32>
    %280 = vector.extract_strided_slice %0 {offsets = [0, 27], sizes = [4, 1], strides = [1, 1]} : vector<8x56xf32> to vector<4x1xf32>
    %281 = vector.extract_strided_slice %262 {offsets = [3, 0], sizes = [1, 64], strides = [1, 1]} : vector<4x64xf32> to vector<1x64xf32>
    %282 = vector.broadcast %280 : vector<4x1xf32> to vector<4x64xf32>
    %283 = vector.broadcast %281 : vector<1x64xf32> to vector<4x64xf32>
    %284 = arith.mulf %282, %283 : vector<4x64xf32>
    %285 = arith.addf %279, %284 : vector<4x64xf32>
    %286 = arith.addf %261, %285 : vector<4x64xf32>
    %287 = vector.extract_strided_slice %112 {offsets = [0, 448], sizes = [4, 64], strides = [1, 1]} : vector<16x640xf32> to vector<4x64xf32>
    %288 = vector.extract_strided_slice %0 {offsets = [0, 28], sizes = [4, 1], strides = [1, 1]} : vector<8x56xf32> to vector<4x1xf32>
    %289 = vector.extract_strided_slice %287 {offsets = [0, 0], sizes = [1, 64], strides = [1, 1]} : vector<4x64xf32> to vector<1x64xf32>
    %290 = vector.broadcast %288 : vector<4x1xf32> to vector<4x64xf32>
    %291 = vector.broadcast %289 : vector<1x64xf32> to vector<4x64xf32>
    %292 = arith.mulf %290, %291 : vector<4x64xf32>
    %293 = vector.extract_strided_slice %0 {offsets = [0, 29], sizes = [4, 1], strides = [1, 1]} : vector<8x56xf32> to vector<4x1xf32>
    %294 = vector.extract_strided_slice %287 {offsets = [1, 0], sizes = [1, 64], strides = [1, 1]} : vector<4x64xf32> to vector<1x64xf32>
    %295 = vector.broadcast %293 : vector<4x1xf32> to vector<4x64xf32>
    %296 = vector.broadcast %294 : vector<1x64xf32> to vector<4x64xf32>
    %297 = arith.mulf %295, %296 : vector<4x64xf32>
    %298 = arith.addf %292, %297 : vector<4x64xf32>
    %299 = vector.extract_strided_slice %0 {offsets = [0, 30], sizes = [4, 1], strides = [1, 1]} : vector<8x56xf32> to vector<4x1xf32>
    %300 = vector.extract_strided_slice %287 {offsets = [2, 0], sizes = [1, 64], strides = [1, 1]} : vector<4x64xf32> to vector<1x64xf32>
    %301 = vector.broadcast %299 : vector<4x1xf32> to vector<4x64xf32>
    %302 = vector.broadcast %300 : vector<1x64xf32> to vector<4x64xf32>
    %303 = arith.mulf %301, %302 : vector<4x64xf32>
    %304 = arith.addf %298, %303 : vector<4x64xf32>
    %305 = vector.extract_strided_slice %0 {offsets = [0, 31], sizes = [4, 1], strides = [1, 1]} : vector<8x56xf32> to vector<4x1xf32>
    %306 = vector.extract_strided_slice %287 {offsets = [3, 0], sizes = [1, 64], strides = [1, 1]} : vector<4x64xf32> to vector<1x64xf32>
    %307 = vector.broadcast %305 : vector<4x1xf32> to vector<4x64xf32>
    %308 = vector.broadcast %306 : vector<1x64xf32> to vector<4x64xf32>
    %309 = arith.mulf %307, %308 : vector<4x64xf32>
    %310 = arith.addf %304, %309 : vector<4x64xf32>
    %311 = arith.addf %286, %310 : vector<4x64xf32>
    %312 = vector.extract_strided_slice %112 {offsets = [0, 512], sizes = [4, 64], strides = [1, 1]} : vector<16x640xf32> to vector<4x64xf32>
    %313 = vector.extract_strided_slice %0 {offsets = [0, 32], sizes = [4, 1], strides = [1, 1]} : vector<8x56xf32> to vector<4x1xf32>
    %314 = vector.extract_strided_slice %312 {offsets = [0, 0], sizes = [1, 64], strides = [1, 1]} : vector<4x64xf32> to vector<1x64xf32>
    %315 = vector.broadcast %313 : vector<4x1xf32> to vector<4x64xf32>
    %316 = vector.broadcast %314 : vector<1x64xf32> to vector<4x64xf32>
    %317 = arith.mulf %315, %316 : vector<4x64xf32>
    %318 = vector.extract_strided_slice %0 {offsets = [0, 33], sizes = [4, 1], strides = [1, 1]} : vector<8x56xf32> to vector<4x1xf32>
    %319 = vector.extract_strided_slice %312 {offsets = [1, 0], sizes = [1, 64], strides = [1, 1]} : vector<4x64xf32> to vector<1x64xf32>
    %320 = vector.broadcast %318 : vector<4x1xf32> to vector<4x64xf32>
    %321 = vector.broadcast %319 : vector<1x64xf32> to vector<4x64xf32>
    %322 = arith.mulf %320, %321 : vector<4x64xf32>
    %323 = arith.addf %317, %322 : vector<4x64xf32>
    %324 = vector.extract_strided_slice %0 {offsets = [0, 34], sizes = [4, 1], strides = [1, 1]} : vector<8x56xf32> to vector<4x1xf32>
    %325 = vector.extract_strided_slice %312 {offsets = [2, 0], sizes = [1, 64], strides = [1, 1]} : vector<4x64xf32> to vector<1x64xf32>
    %326 = vector.broadcast %324 : vector<4x1xf32> to vector<4x64xf32>
    %327 = vector.broadcast %325 : vector<1x64xf32> to vector<4x64xf32>
    %328 = arith.mulf %326, %327 : vector<4x64xf32>
    %329 = arith.addf %323, %328 : vector<4x64xf32>
    %330 = vector.extract_strided_slice %0 {offsets = [0, 35], sizes = [4, 1], strides = [1, 1]} : vector<8x56xf32> to vector<4x1xf32>
    %331 = vector.extract_strided_slice %312 {offsets = [3, 0], sizes = [1, 64], strides = [1, 1]} : vector<4x64xf32> to vector<1x64xf32>
    %332 = vector.broadcast %330 : vector<4x1xf32> to vector<4x64xf32>
    %333 = vector.broadcast %331 : vector<1x64xf32> to vector<4x64xf32>
    %334 = arith.mulf %332, %333 : vector<4x64xf32>
    %335 = arith.addf %329, %334 : vector<4x64xf32>
    %336 = arith.addf %311, %335 : vector<4x64xf32>
    %cst_20 = arith.constant dense<0.000000e+00> : vector<4xf32>
    %337 = vector.multi_reduction <add>, %336, %cst_20 [1] : vector<4x64xf32> to vector<4xf32>
    %338 = vector.shape_cast %337 : vector<4xf32> to vector<4x1xf32>
    %339 = arith.mulf %336, %336 : vector<4x64xf32>
    %cst_21 = arith.constant dense<0.000000e+00> : vector<4xf32>
    %340 = vector.multi_reduction <add>, %339, %cst_21 [1] : vector<4x64xf32> to vector<4xf32>
    %341 = vector.shape_cast %340 : vector<4xf32> to vector<4x1xf32>
    %cst_22 = arith.constant 1.562500e-02 : f32
    %342 = vector.broadcast %cst_22 : f32 to vector<4x1xf32>
    %343 = arith.mulf %338, %342 : vector<4x1xf32>
    %cst_23 = arith.constant 1.562500e-02 : f32
    %344 = vector.broadcast %cst_23 : f32 to vector<4x1xf32>
    %345 = arith.mulf %341, %344 : vector<4x1xf32>
    %346 = arith.mulf %343, %343 : vector<4x1xf32>
    %347 = arith.subf %345, %346 : vector<4x1xf32>
    %cst_24 = arith.constant 0.000000e+00 : f32
    %348 = vector.broadcast %cst_24 : f32 to vector<4x1xf32>
    %349 = arith.maximumf %347, %348 : vector<4x1xf32>
    %cst_25 = arith.constant 9.99999974E-6 : f32
    %350 = vector.broadcast %cst_25 : f32 to vector<4x1xf32>
    %351 = arith.addf %349, %350 : vector<4x1xf32>
    %352 = math.rsqrt %351 : vector<4x1xf32>
    %353 = arith.mulf %352, %3 : vector<4x1xf32>
    %354 = arith.mulf %343, %353 : vector<4x1xf32>
    %355 = arith.subf %4, %354 : vector<4x1xf32>
    %356 = vector.broadcast %353 : vector<4x1xf32> to vector<4x64xf32>
    %357 = arith.mulf %336, %356 : vector<4x64xf32>
    %358 = vector.broadcast %355 : vector<4x1xf32> to vector<4x64xf32>
    %359 = arith.addf %357, %358 : vector<4x64xf32>
    %cst_26 = arith.constant 0.00999999977 : f32
    %360 = vector.broadcast %cst_26 : f32 to vector<4x64xf32>
    %361 = arith.mulf %360, %359 : vector<4x64xf32>
    %362 = arith.maximumf %359, %361 : vector<4x64xf32>
    %363 = vector.extract_strided_slice %112 {offsets = [4, 256], sizes = [4, 64], strides = [1, 1]} : vector<16x640xf32> to vector<4x64xf32>
    %364 = vector.extract_strided_slice %112 {offsets = [4, 320], sizes = [4, 64], strides = [1, 1]} : vector<16x640xf32> to vector<4x64xf32>
    %365 = arith.addf %363, %364 : vector<4x64xf32>
    %366 = vector.extract_strided_slice %112 {offsets = [4, 448], sizes = [4, 64], strides = [1, 1]} : vector<16x640xf32> to vector<4x64xf32>
    %367 = arith.addf %365, %366 : vector<4x64xf32>
    %368 = vector.extract_strided_slice %112 {offsets = [4, 512], sizes = [4, 64], strides = [1, 1]} : vector<16x640xf32> to vector<4x64xf32>
    %369 = arith.addf %367, %368 : vector<4x64xf32>
    %cst_27 = arith.constant 2.500000e-01 : f32
    %370 = vector.broadcast %cst_27 : f32 to vector<4x64xf32>
    %371 = arith.mulf %369, %370 : vector<4x64xf32>
    %372 = vector.extract_strided_slice %0 {offsets = [0, 44], sizes = [8, 1], strides = [1, 1]} : vector<8x56xf32> to vector<8x1xf32>
    %373 = vector.extract_strided_slice %371 {offsets = [0, 0], sizes = [1, 64], strides = [1, 1]} : vector<4x64xf32> to vector<1x64xf32>
    %374 = vector.broadcast %372 : vector<8x1xf32> to vector<8x64xf32>
    %375 = vector.broadcast %373 : vector<1x64xf32> to vector<8x64xf32>
    %376 = arith.mulf %374, %375 : vector<8x64xf32>
    %377 = vector.extract_strided_slice %0 {offsets = [0, 45], sizes = [8, 1], strides = [1, 1]} : vector<8x56xf32> to vector<8x1xf32>
    %378 = vector.extract_strided_slice %371 {offsets = [1, 0], sizes = [1, 64], strides = [1, 1]} : vector<4x64xf32> to vector<1x64xf32>
    %379 = vector.broadcast %377 : vector<8x1xf32> to vector<8x64xf32>
    %380 = vector.broadcast %378 : vector<1x64xf32> to vector<8x64xf32>
    %381 = arith.mulf %379, %380 : vector<8x64xf32>
    %382 = arith.addf %376, %381 : vector<8x64xf32>
    %383 = vector.extract_strided_slice %0 {offsets = [0, 46], sizes = [8, 1], strides = [1, 1]} : vector<8x56xf32> to vector<8x1xf32>
    %384 = vector.extract_strided_slice %371 {offsets = [2, 0], sizes = [1, 64], strides = [1, 1]} : vector<4x64xf32> to vector<1x64xf32>
    %385 = vector.broadcast %383 : vector<8x1xf32> to vector<8x64xf32>
    %386 = vector.broadcast %384 : vector<1x64xf32> to vector<8x64xf32>
    %387 = arith.mulf %385, %386 : vector<8x64xf32>
    %388 = arith.addf %382, %387 : vector<8x64xf32>
    %389 = vector.extract_strided_slice %0 {offsets = [0, 47], sizes = [8, 1], strides = [1, 1]} : vector<8x56xf32> to vector<8x1xf32>
    %390 = vector.extract_strided_slice %371 {offsets = [3, 0], sizes = [1, 64], strides = [1, 1]} : vector<4x64xf32> to vector<1x64xf32>
    %391 = vector.broadcast %389 : vector<8x1xf32> to vector<8x64xf32>
    %392 = vector.broadcast %390 : vector<1x64xf32> to vector<8x64xf32>
    %393 = arith.mulf %391, %392 : vector<8x64xf32>
    %394 = arith.addf %388, %393 : vector<8x64xf32>
    %cst_28 = arith.constant dense<0.000000e+00> : vector<8xf32>
    %395 = vector.multi_reduction <add>, %394, %cst_28 [1] : vector<8x64xf32> to vector<8xf32>
    %396 = vector.shape_cast %395 : vector<8xf32> to vector<8x1xf32>
    %397 = arith.mulf %394, %394 : vector<8x64xf32>
    %cst_29 = arith.constant dense<0.000000e+00> : vector<8xf32>
    %398 = vector.multi_reduction <add>, %397, %cst_29 [1] : vector<8x64xf32> to vector<8xf32>
    %399 = vector.shape_cast %398 : vector<8xf32> to vector<8x1xf32>
    %cst_30 = arith.constant 1.562500e-02 : f32
    %400 = vector.broadcast %cst_30 : f32 to vector<8x1xf32>
    %401 = arith.mulf %396, %400 : vector<8x1xf32>
    %cst_31 = arith.constant 1.562500e-02 : f32
    %402 = vector.broadcast %cst_31 : f32 to vector<8x1xf32>
    %403 = arith.mulf %399, %402 : vector<8x1xf32>
    %404 = arith.mulf %401, %401 : vector<8x1xf32>
    %405 = arith.subf %403, %404 : vector<8x1xf32>
    %cst_32 = arith.constant 0.000000e+00 : f32
    %406 = vector.broadcast %cst_32 : f32 to vector<8x1xf32>
    %407 = arith.maximumf %405, %406 : vector<8x1xf32>
    %cst_33 = arith.constant 9.99999974E-6 : f32
    %408 = vector.broadcast %cst_33 : f32 to vector<8x1xf32>
    %409 = arith.addf %407, %408 : vector<8x1xf32>
    %410 = math.rsqrt %409 : vector<8x1xf32>
    %411 = arith.mulf %410, %7 : vector<8x1xf32>
    %412 = arith.mulf %401, %411 : vector<8x1xf32>
    %413 = arith.subf %8, %412 : vector<8x1xf32>
    %414 = vector.broadcast %411 : vector<8x1xf32> to vector<8x64xf32>
    %415 = arith.mulf %394, %414 : vector<8x64xf32>
    %416 = vector.broadcast %413 : vector<8x1xf32> to vector<8x64xf32>
    %417 = arith.addf %415, %416 : vector<8x64xf32>
    %418 = vector.extract_strided_slice %0 {offsets = [0, 40], sizes = [8, 1], strides = [1, 1]} : vector<8x56xf32> to vector<8x1xf32>
    %419 = vector.extract_strided_slice %362 {offsets = [0, 0], sizes = [1, 64], strides = [1, 1]} : vector<4x64xf32> to vector<1x64xf32>
    %420 = vector.broadcast %418 : vector<8x1xf32> to vector<8x64xf32>
    %421 = vector.broadcast %419 : vector<1x64xf32> to vector<8x64xf32>
    %422 = arith.mulf %420, %421 : vector<8x64xf32>
    %423 = vector.extract_strided_slice %0 {offsets = [0, 41], sizes = [8, 1], strides = [1, 1]} : vector<8x56xf32> to vector<8x1xf32>
    %424 = vector.extract_strided_slice %362 {offsets = [1, 0], sizes = [1, 64], strides = [1, 1]} : vector<4x64xf32> to vector<1x64xf32>
    %425 = vector.broadcast %423 : vector<8x1xf32> to vector<8x64xf32>
    %426 = vector.broadcast %424 : vector<1x64xf32> to vector<8x64xf32>
    %427 = arith.mulf %425, %426 : vector<8x64xf32>
    %428 = arith.addf %422, %427 : vector<8x64xf32>
    %429 = vector.extract_strided_slice %0 {offsets = [0, 42], sizes = [8, 1], strides = [1, 1]} : vector<8x56xf32> to vector<8x1xf32>
    %430 = vector.extract_strided_slice %362 {offsets = [2, 0], sizes = [1, 64], strides = [1, 1]} : vector<4x64xf32> to vector<1x64xf32>
    %431 = vector.broadcast %429 : vector<8x1xf32> to vector<8x64xf32>
    %432 = vector.broadcast %430 : vector<1x64xf32> to vector<8x64xf32>
    %433 = arith.mulf %431, %432 : vector<8x64xf32>
    %434 = arith.addf %428, %433 : vector<8x64xf32>
    %435 = vector.extract_strided_slice %0 {offsets = [0, 43], sizes = [8, 1], strides = [1, 1]} : vector<8x56xf32> to vector<8x1xf32>
    %436 = vector.extract_strided_slice %362 {offsets = [3, 0], sizes = [1, 64], strides = [1, 1]} : vector<4x64xf32> to vector<1x64xf32>
    %437 = vector.broadcast %435 : vector<8x1xf32> to vector<8x64xf32>
    %438 = vector.broadcast %436 : vector<1x64xf32> to vector<8x64xf32>
    %439 = arith.mulf %437, %438 : vector<8x64xf32>
    %440 = arith.addf %434, %439 : vector<8x64xf32>
    %cst_34 = arith.constant dense<0.000000e+00> : vector<8xf32>
    %441 = vector.multi_reduction <add>, %440, %cst_34 [1] : vector<8x64xf32> to vector<8xf32>
    %442 = vector.shape_cast %441 : vector<8xf32> to vector<8x1xf32>
    %443 = arith.mulf %440, %440 : vector<8x64xf32>
    %cst_35 = arith.constant dense<0.000000e+00> : vector<8xf32>
    %444 = vector.multi_reduction <add>, %443, %cst_35 [1] : vector<8x64xf32> to vector<8xf32>
    %445 = vector.shape_cast %444 : vector<8xf32> to vector<8x1xf32>
    %cst_36 = arith.constant 1.562500e-02 : f32
    %446 = vector.broadcast %cst_36 : f32 to vector<8x1xf32>
    %447 = arith.mulf %442, %446 : vector<8x1xf32>
    %cst_37 = arith.constant 1.562500e-02 : f32
    %448 = vector.broadcast %cst_37 : f32 to vector<8x1xf32>
    %449 = arith.mulf %445, %448 : vector<8x1xf32>
    %450 = arith.mulf %447, %447 : vector<8x1xf32>
    %451 = arith.subf %449, %450 : vector<8x1xf32>
    %cst_38 = arith.constant 0.000000e+00 : f32
    %452 = vector.broadcast %cst_38 : f32 to vector<8x1xf32>
    %453 = arith.maximumf %451, %452 : vector<8x1xf32>
    %cst_39 = arith.constant 9.99999974E-6 : f32
    %454 = vector.broadcast %cst_39 : f32 to vector<8x1xf32>
    %455 = arith.addf %453, %454 : vector<8x1xf32>
    %456 = math.rsqrt %455 : vector<8x1xf32>
    %457 = arith.mulf %456, %5 : vector<8x1xf32>
    %458 = arith.mulf %447, %457 : vector<8x1xf32>
    %459 = arith.subf %6, %458 : vector<8x1xf32>
    %460 = vector.broadcast %457 : vector<8x1xf32> to vector<8x64xf32>
    %461 = arith.mulf %440, %460 : vector<8x64xf32>
    %462 = vector.broadcast %459 : vector<8x1xf32> to vector<8x64xf32>
    %463 = arith.addf %461, %462 : vector<8x64xf32>
    %464 = arith.addf %463, %417 : vector<8x64xf32>
    %cst_40 = arith.constant 0.00999999977 : f32
    %465 = vector.broadcast %cst_40 : f32 to vector<8x64xf32>
    %466 = arith.mulf %465, %464 : vector<8x64xf32>
    %467 = arith.maximumf %464, %466 : vector<8x64xf32>
    %c0_41 = arith.constant 0 : index
    %c0_42 = arith.constant 0 : index
    %468 = vector.load %arg4[%c0_41, %c0_42] : memref<16x64xf32, #tpu.memory_space<vmem>>, vector<8x64xf32>
    tpu.vector_store %arg4[%c0_41, %c0_42], %467 {strides = array<i32>} : memref<16x64xf32, #tpu.memory_space<vmem>>, vector<8x64xf32>,
    %469 = vector.extract_strided_slice %112 {offsets = [8, 0], sizes = [4, 64], strides = [1, 1]} : vector<16x640xf32> to vector<4x64xf32>
    %470 = vector.extract_strided_slice %0 {offsets = [0, 0], sizes = [4, 1], strides = [1, 1]} : vector<8x56xf32> to vector<4x1xf32>
    %471 = vector.extract_strided_slice %469 {offsets = [0, 0], sizes = [1, 64], strides = [1, 1]} : vector<4x64xf32> to vector<1x64xf32>
    %472 = vector.broadcast %470 : vector<4x1xf32> to vector<4x64xf32>
    %473 = vector.broadcast %471 : vector<1x64xf32> to vector<4x64xf32>
    %474 = arith.mulf %472, %473 : vector<4x64xf32>
    %475 = vector.extract_strided_slice %0 {offsets = [0, 1], sizes = [4, 1], strides = [1, 1]} : vector<8x56xf32> to vector<4x1xf32>
    %476 = vector.extract_strided_slice %469 {offsets = [1, 0], sizes = [1, 64], strides = [1, 1]} : vector<4x64xf32> to vector<1x64xf32>
    %477 = vector.broadcast %475 : vector<4x1xf32> to vector<4x64xf32>
    %478 = vector.broadcast %476 : vector<1x64xf32> to vector<4x64xf32>
    %479 = arith.mulf %477, %478 : vector<4x64xf32>
    %480 = arith.addf %474, %479 : vector<4x64xf32>
    %481 = vector.extract_strided_slice %0 {offsets = [0, 2], sizes = [4, 1], strides = [1, 1]} : vector<8x56xf32> to vector<4x1xf32>
    %482 = vector.extract_strided_slice %469 {offsets = [2, 0], sizes = [1, 64], strides = [1, 1]} : vector<4x64xf32> to vector<1x64xf32>
    %483 = vector.broadcast %481 : vector<4x1xf32> to vector<4x64xf32>
    %484 = vector.broadcast %482 : vector<1x64xf32> to vector<4x64xf32>
    %485 = arith.mulf %483, %484 : vector<4x64xf32>
    %486 = arith.addf %480, %485 : vector<4x64xf32>
    %487 = vector.extract_strided_slice %0 {offsets = [0, 3], sizes = [4, 1], strides = [1, 1]} : vector<8x56xf32> to vector<4x1xf32>
    %488 = vector.extract_strided_slice %469 {offsets = [3, 0], sizes = [1, 64], strides = [1, 1]} : vector<4x64xf32> to vector<1x64xf32>
    %489 = vector.broadcast %487 : vector<4x1xf32> to vector<4x64xf32>
    %490 = vector.broadcast %488 : vector<1x64xf32> to vector<4x64xf32>
    %491 = arith.mulf %489, %490 : vector<4x64xf32>
    %492 = arith.addf %486, %491 : vector<4x64xf32>
    %493 = vector.extract_strided_slice %112 {offsets = [8, 64], sizes = [4, 64], strides = [1, 1]} : vector<16x640xf32> to vector<4x64xf32>
    %494 = vector.extract_strided_slice %0 {offsets = [0, 4], sizes = [4, 1], strides = [1, 1]} : vector<8x56xf32> to vector<4x1xf32>
    %495 = vector.extract_strided_slice %493 {offsets = [0, 0], sizes = [1, 64], strides = [1, 1]} : vector<4x64xf32> to vector<1x64xf32>
    %496 = vector.broadcast %494 : vector<4x1xf32> to vector<4x64xf32>
    %497 = vector.broadcast %495 : vector<1x64xf32> to vector<4x64xf32>
    %498 = arith.mulf %496, %497 : vector<4x64xf32>
    %499 = vector.extract_strided_slice %0 {offsets = [0, 5], sizes = [4, 1], strides = [1, 1]} : vector<8x56xf32> to vector<4x1xf32>
    %500 = vector.extract_strided_slice %493 {offsets = [1, 0], sizes = [1, 64], strides = [1, 1]} : vector<4x64xf32> to vector<1x64xf32>
    %501 = vector.broadcast %499 : vector<4x1xf32> to vector<4x64xf32>
    %502 = vector.broadcast %500 : vector<1x64xf32> to vector<4x64xf32>
    %503 = arith.mulf %501, %502 : vector<4x64xf32>
    %504 = arith.addf %498, %503 : vector<4x64xf32>
    %505 = vector.extract_strided_slice %0 {offsets = [0, 6], sizes = [4, 1], strides = [1, 1]} : vector<8x56xf32> to vector<4x1xf32>
    %506 = vector.extract_strided_slice %493 {offsets = [2, 0], sizes = [1, 64], strides = [1, 1]} : vector<4x64xf32> to vector<1x64xf32>
    %507 = vector.broadcast %505 : vector<4x1xf32> to vector<4x64xf32>
    %508 = vector.broadcast %506 : vector<1x64xf32> to vector<4x64xf32>
    %509 = arith.mulf %507, %508 : vector<4x64xf32>
    %510 = arith.addf %504, %509 : vector<4x64xf32>
    %511 = vector.extract_strided_slice %0 {offsets = [0, 7], sizes = [4, 1], strides = [1, 1]} : vector<8x56xf32> to vector<4x1xf32>
    %512 = vector.extract_strided_slice %493 {offsets = [3, 0], sizes = [1, 64], strides = [1, 1]} : vector<4x64xf32> to vector<1x64xf32>
    %513 = vector.broadcast %511 : vector<4x1xf32> to vector<4x64xf32>
    %514 = vector.broadcast %512 : vector<1x64xf32> to vector<4x64xf32>
    %515 = arith.mulf %513, %514 : vector<4x64xf32>
    %516 = arith.addf %510, %515 : vector<4x64xf32>
    %517 = arith.addf %492, %516 : vector<4x64xf32>
    %518 = vector.extract_strided_slice %112 {offsets = [8, 128], sizes = [4, 64], strides = [1, 1]} : vector<16x640xf32> to vector<4x64xf32>
    %519 = vector.extract_strided_slice %0 {offsets = [0, 8], sizes = [4, 1], strides = [1, 1]} : vector<8x56xf32> to vector<4x1xf32>
    %520 = vector.extract_strided_slice %518 {offsets = [0, 0], sizes = [1, 64], strides = [1, 1]} : vector<4x64xf32> to vector<1x64xf32>
    %521 = vector.broadcast %519 : vector<4x1xf32> to vector<4x64xf32>
    %522 = vector.broadcast %520 : vector<1x64xf32> to vector<4x64xf32>
    %523 = arith.mulf %521, %522 : vector<4x64xf32>
    %524 = vector.extract_strided_slice %0 {offsets = [0, 9], sizes = [4, 1], strides = [1, 1]} : vector<8x56xf32> to vector<4x1xf32>
    %525 = vector.extract_strided_slice %518 {offsets = [1, 0], sizes = [1, 64], strides = [1, 1]} : vector<4x64xf32> to vector<1x64xf32>
    %526 = vector.broadcast %524 : vector<4x1xf32> to vector<4x64xf32>
    %527 = vector.broadcast %525 : vector<1x64xf32> to vector<4x64xf32>
    %528 = arith.mulf %526, %527 : vector<4x64xf32>
    %529 = arith.addf %523, %528 : vector<4x64xf32>
    %530 = vector.extract_strided_slice %0 {offsets = [0, 10], sizes = [4, 1], strides = [1, 1]} : vector<8x56xf32> to vector<4x1xf32>
    %531 = vector.extract_strided_slice %518 {offsets = [2, 0], sizes = [1, 64], strides = [1, 1]} : vector<4x64xf32> to vector<1x64xf32>
    %532 = vector.broadcast %530 : vector<4x1xf32> to vector<4x64xf32>
    %533 = vector.broadcast %531 : vector<1x64xf32> to vector<4x64xf32>
    %534 = arith.mulf %532, %533 : vector<4x64xf32>
    %535 = arith.addf %529, %534 : vector<4x64xf32>
    %536 = vector.extract_strided_slice %0 {offsets = [0, 11], sizes = [4, 1], strides = [1, 1]} : vector<8x56xf32> to vector<4x1xf32>
    %537 = vector.extract_strided_slice %518 {offsets = [3, 0], sizes = [1, 64], strides = [1, 1]} : vector<4x64xf32> to vector<1x64xf32>
    %538 = vector.broadcast %536 : vector<4x1xf32> to vector<4x64xf32>
    %539 = vector.broadcast %537 : vector<1x64xf32> to vector<4x64xf32>
    %540 = arith.mulf %538, %539 : vector<4x64xf32>
    %541 = arith.addf %535, %540 : vector<4x64xf32>
    %542 = arith.addf %517, %541 : vector<4x64xf32>
    %543 = vector.extract_strided_slice %112 {offsets = [8, 192], sizes = [4, 64], strides = [1, 1]} : vector<16x640xf32> to vector<4x64xf32>
    %544 = vector.extract_strided_slice %0 {offsets = [0, 12], sizes = [4, 1], strides = [1, 1]} : vector<8x56xf32> to vector<4x1xf32>
    %545 = vector.extract_strided_slice %543 {offsets = [0, 0], sizes = [1, 64], strides = [1, 1]} : vector<4x64xf32> to vector<1x64xf32>
    %546 = vector.broadcast %544 : vector<4x1xf32> to vector<4x64xf32>
    %547 = vector.broadcast %545 : vector<1x64xf32> to vector<4x64xf32>
    %548 = arith.mulf %546, %547 : vector<4x64xf32>
    %549 = vector.extract_strided_slice %0 {offsets = [0, 13], sizes = [4, 1], strides = [1, 1]} : vector<8x56xf32> to vector<4x1xf32>
    %550 = vector.extract_strided_slice %543 {offsets = [1, 0], sizes = [1, 64], strides = [1, 1]} : vector<4x64xf32> to vector<1x64xf32>
    %551 = vector.broadcast %549 : vector<4x1xf32> to vector<4x64xf32>
    %552 = vector.broadcast %550 : vector<1x64xf32> to vector<4x64xf32>
    %553 = arith.mulf %551, %552 : vector<4x64xf32>
    %554 = arith.addf %548, %553 : vector<4x64xf32>
    %555 = vector.extract_strided_slice %0 {offsets = [0, 14], sizes = [4, 1], strides = [1, 1]} : vector<8x56xf32> to vector<4x1xf32>
    %556 = vector.extract_strided_slice %543 {offsets = [2, 0], sizes = [1, 64], strides = [1, 1]} : vector<4x64xf32> to vector<1x64xf32>
    %557 = vector.broadcast %555 : vector<4x1xf32> to vector<4x64xf32>
    %558 = vector.broadcast %556 : vector<1x64xf32> to vector<4x64xf32>
    %559 = arith.mulf %557, %558 : vector<4x64xf32>
    %560 = arith.addf %554, %559 : vector<4x64xf32>
    %561 = vector.extract_strided_slice %0 {offsets = [0, 15], sizes = [4, 1], strides = [1, 1]} : vector<8x56xf32> to vector<4x1xf32>
    %562 = vector.extract_strided_slice %543 {offsets = [3, 0], sizes = [1, 64], strides = [1, 1]} : vector<4x64xf32> to vector<1x64xf32>
    %563 = vector.broadcast %561 : vector<4x1xf32> to vector<4x64xf32>
    %564 = vector.broadcast %562 : vector<1x64xf32> to vector<4x64xf32>
    %565 = arith.mulf %563, %564 : vector<4x64xf32>
    %566 = arith.addf %560, %565 : vector<4x64xf32>
    %567 = arith.addf %542, %566 : vector<4x64xf32>
    %568 = vector.extract_strided_slice %112 {offsets = [8, 256], sizes = [4, 64], strides = [1, 1]} : vector<16x640xf32> to vector<4x64xf32>
    %569 = vector.extract_strided_slice %0 {offsets = [0, 16], sizes = [4, 1], strides = [1, 1]} : vector<8x56xf32> to vector<4x1xf32>
    %570 = vector.extract_strided_slice %568 {offsets = [0, 0], sizes = [1, 64], strides = [1, 1]} : vector<4x64xf32> to vector<1x64xf32>
    %571 = vector.broadcast %569 : vector<4x1xf32> to vector<4x64xf32>
    %572 = vector.broadcast %570 : vector<1x64xf32> to vector<4x64xf32>
    %573 = arith.mulf %571, %572 : vector<4x64xf32>
    %574 = vector.extract_strided_slice %0 {offsets = [0, 17], sizes = [4, 1], strides = [1, 1]} : vector<8x56xf32> to vector<4x1xf32>
    %575 = vector.extract_strided_slice %568 {offsets = [1, 0], sizes = [1, 64], strides = [1, 1]} : vector<4x64xf32> to vector<1x64xf32>
    %576 = vector.broadcast %574 : vector<4x1xf32> to vector<4x64xf32>
    %577 = vector.broadcast %575 : vector<1x64xf32> to vector<4x64xf32>
    %578 = arith.mulf %576, %577 : vector<4x64xf32>
    %579 = arith.addf %573, %578 : vector<4x64xf32>
    %580 = vector.extract_strided_slice %0 {offsets = [0, 18], sizes = [4, 1], strides = [1, 1]} : vector<8x56xf32> to vector<4x1xf32>
    %581 = vector.extract_strided_slice %568 {offsets = [2, 0], sizes = [1, 64], strides = [1, 1]} : vector<4x64xf32> to vector<1x64xf32>
    %582 = vector.broadcast %580 : vector<4x1xf32> to vector<4x64xf32>
    %583 = vector.broadcast %581 : vector<1x64xf32> to vector<4x64xf32>
    %584 = arith.mulf %582, %583 : vector<4x64xf32>
    %585 = arith.addf %579, %584 : vector<4x64xf32>
    %586 = vector.extract_strided_slice %0 {offsets = [0, 19], sizes = [4, 1], strides = [1, 1]} : vector<8x56xf32> to vector<4x1xf32>
    %587 = vector.extract_strided_slice %568 {offsets = [3, 0], sizes = [1, 64], strides = [1, 1]} : vector<4x64xf32> to vector<1x64xf32>
    %588 = vector.broadcast %586 : vector<4x1xf32> to vector<4x64xf32>
    %589 = vector.broadcast %587 : vector<1x64xf32> to vector<4x64xf32>
    %590 = arith.mulf %588, %589 : vector<4x64xf32>
    %591 = arith.addf %585, %590 : vector<4x64xf32>
    %592 = arith.addf %567, %591 : vector<4x64xf32>
    %593 = vector.extract_strided_slice %112 {offsets = [8, 320], sizes = [4, 64], strides = [1, 1]} : vector<16x640xf32> to vector<4x64xf32>
    %594 = vector.extract_strided_slice %0 {offsets = [0, 20], sizes = [4, 1], strides = [1, 1]} : vector<8x56xf32> to vector<4x1xf32>
    %595 = vector.extract_strided_slice %593 {offsets = [0, 0], sizes = [1, 64], strides = [1, 1]} : vector<4x64xf32> to vector<1x64xf32>
    %596 = vector.broadcast %594 : vector<4x1xf32> to vector<4x64xf32>
    %597 = vector.broadcast %595 : vector<1x64xf32> to vector<4x64xf32>
    %598 = arith.mulf %596, %597 : vector<4x64xf32>
    %599 = vector.extract_strided_slice %0 {offsets = [0, 21], sizes = [4, 1], strides = [1, 1]} : vector<8x56xf32> to vector<4x1xf32>
    %600 = vector.extract_strided_slice %593 {offsets = [1, 0], sizes = [1, 64], strides = [1, 1]} : vector<4x64xf32> to vector<1x64xf32>
    %601 = vector.broadcast %599 : vector<4x1xf32> to vector<4x64xf32>
    %602 = vector.broadcast %600 : vector<1x64xf32> to vector<4x64xf32>
    %603 = arith.mulf %601, %602 : vector<4x64xf32>
    %604 = arith.addf %598, %603 : vector<4x64xf32>
    %605 = vector.extract_strided_slice %0 {offsets = [0, 22], sizes = [4, 1], strides = [1, 1]} : vector<8x56xf32> to vector<4x1xf32>
    %606 = vector.extract_strided_slice %593 {offsets = [2, 0], sizes = [1, 64], strides = [1, 1]} : vector<4x64xf32> to vector<1x64xf32>
    %607 = vector.broadcast %605 : vector<4x1xf32> to vector<4x64xf32>
    %608 = vector.broadcast %606 : vector<1x64xf32> to vector<4x64xf32>
    %609 = arith.mulf %607, %608 : vector<4x64xf32>
    %610 = arith.addf %604, %609 : vector<4x64xf32>
    %611 = vector.extract_strided_slice %0 {offsets = [0, 23], sizes = [4, 1], strides = [1, 1]} : vector<8x56xf32> to vector<4x1xf32>
    %612 = vector.extract_strided_slice %593 {offsets = [3, 0], sizes = [1, 64], strides = [1, 1]} : vector<4x64xf32> to vector<1x64xf32>
    %613 = vector.broadcast %611 : vector<4x1xf32> to vector<4x64xf32>
    %614 = vector.broadcast %612 : vector<1x64xf32> to vector<4x64xf32>
    %615 = arith.mulf %613, %614 : vector<4x64xf32>
    %616 = arith.addf %610, %615 : vector<4x64xf32>
    %617 = arith.addf %592, %616 : vector<4x64xf32>
    %618 = vector.extract_strided_slice %112 {offsets = [8, 384], sizes = [4, 64], strides = [1, 1]} : vector<16x640xf32> to vector<4x64xf32>
    %619 = vector.extract_strided_slice %0 {offsets = [0, 24], sizes = [4, 1], strides = [1, 1]} : vector<8x56xf32> to vector<4x1xf32>
    %620 = vector.extract_strided_slice %618 {offsets = [0, 0], sizes = [1, 64], strides = [1, 1]} : vector<4x64xf32> to vector<1x64xf32>
    %621 = vector.broadcast %619 : vector<4x1xf32> to vector<4x64xf32>
    %622 = vector.broadcast %620 : vector<1x64xf32> to vector<4x64xf32>
    %623 = arith.mulf %621, %622 : vector<4x64xf32>
    %624 = vector.extract_strided_slice %0 {offsets = [0, 25], sizes = [4, 1], strides = [1, 1]} : vector<8x56xf32> to vector<4x1xf32>
    %625 = vector.extract_strided_slice %618 {offsets = [1, 0], sizes = [1, 64], strides = [1, 1]} : vector<4x64xf32> to vector<1x64xf32>
    %626 = vector.broadcast %624 : vector<4x1xf32> to vector<4x64xf32>
    %627 = vector.broadcast %625 : vector<1x64xf32> to vector<4x64xf32>
    %628 = arith.mulf %626, %627 : vector<4x64xf32>
    %629 = arith.addf %623, %628 : vector<4x64xf32>
    %630 = vector.extract_strided_slice %0 {offsets = [0, 26], sizes = [4, 1], strides = [1, 1]} : vector<8x56xf32> to vector<4x1xf32>
    %631 = vector.extract_strided_slice %618 {offsets = [2, 0], sizes = [1, 64], strides = [1, 1]} : vector<4x64xf32> to vector<1x64xf32>
    %632 = vector.broadcast %630 : vector<4x1xf32> to vector<4x64xf32>
    %633 = vector.broadcast %631 : vector<1x64xf32> to vector<4x64xf32>
    %634 = arith.mulf %632, %633 : vector<4x64xf32>
    %635 = arith.addf %629, %634 : vector<4x64xf32>
    %636 = vector.extract_strided_slice %0 {offsets = [0, 27], sizes = [4, 1], strides = [1, 1]} : vector<8x56xf32> to vector<4x1xf32>
    %637 = vector.extract_strided_slice %618 {offsets = [3, 0], sizes = [1, 64], strides = [1, 1]} : vector<4x64xf32> to vector<1x64xf32>
    %638 = vector.broadcast %636 : vector<4x1xf32> to vector<4x64xf32>
    %639 = vector.broadcast %637 : vector<1x64xf32> to vector<4x64xf32>
    %640 = arith.mulf %638, %639 : vector<4x64xf32>
    %641 = arith.addf %635, %640 : vector<4x64xf32>
    %642 = arith.addf %617, %641 : vector<4x64xf32>
    %643 = vector.extract_strided_slice %112 {offsets = [8, 448], sizes = [4, 64], strides = [1, 1]} : vector<16x640xf32> to vector<4x64xf32>
    %644 = vector.extract_strided_slice %0 {offsets = [0, 28], sizes = [4, 1], strides = [1, 1]} : vector<8x56xf32> to vector<4x1xf32>
    %645 = vector.extract_strided_slice %643 {offsets = [0, 0], sizes = [1, 64], strides = [1, 1]} : vector<4x64xf32> to vector<1x64xf32>
    %646 = vector.broadcast %644 : vector<4x1xf32> to vector<4x64xf32>
    %647 = vector.broadcast %645 : vector<1x64xf32> to vector<4x64xf32>
    %648 = arith.mulf %646, %647 : vector<4x64xf32>
    %649 = vector.extract_strided_slice %0 {offsets = [0, 29], sizes = [4, 1], strides = [1, 1]} : vector<8x56xf32> to vector<4x1xf32>
    %650 = vector.extract_strided_slice %643 {offsets = [1, 0], sizes = [1, 64], strides = [1, 1]} : vector<4x64xf32> to vector<1x64xf32>
    %651 = vector.broadcast %649 : vector<4x1xf32> to vector<4x64xf32>
    %652 = vector.broadcast %650 : vector<1x64xf32> to vector<4x64xf32>
    %653 = arith.mulf %651, %652 : vector<4x64xf32>
    %654 = arith.addf %648, %653 : vector<4x64xf32>
    %655 = vector.extract_strided_slice %0 {offsets = [0, 30], sizes = [4, 1], strides = [1, 1]} : vector<8x56xf32> to vector<4x1xf32>
    %656 = vector.extract_strided_slice %643 {offsets = [2, 0], sizes = [1, 64], strides = [1, 1]} : vector<4x64xf32> to vector<1x64xf32>
    %657 = vector.broadcast %655 : vector<4x1xf32> to vector<4x64xf32>
    %658 = vector.broadcast %656 : vector<1x64xf32> to vector<4x64xf32>
    %659 = arith.mulf %657, %658 : vector<4x64xf32>
    %660 = arith.addf %654, %659 : vector<4x64xf32>
    %661 = vector.extract_strided_slice %0 {offsets = [0, 31], sizes = [4, 1], strides = [1, 1]} : vector<8x56xf32> to vector<4x1xf32>
    %662 = vector.extract_strided_slice %643 {offsets = [3, 0], sizes = [1, 64], strides = [1, 1]} : vector<4x64xf32> to vector<1x64xf32>
    %663 = vector.broadcast %661 : vector<4x1xf32> to vector<4x64xf32>
    %664 = vector.broadcast %662 : vector<1x64xf32> to vector<4x64xf32>
    %665 = arith.mulf %663, %664 : vector<4x64xf32>
    %666 = arith.addf %660, %665 : vector<4x64xf32>
    %667 = arith.addf %642, %666 : vector<4x64xf32>
    %668 = vector.extract_strided_slice %112 {offsets = [8, 512], sizes = [4, 64], strides = [1, 1]} : vector<16x640xf32> to vector<4x64xf32>
    %669 = vector.extract_strided_slice %0 {offsets = [0, 32], sizes = [4, 1], strides = [1, 1]} : vector<8x56xf32> to vector<4x1xf32>
    %670 = vector.extract_strided_slice %668 {offsets = [0, 0], sizes = [1, 64], strides = [1, 1]} : vector<4x64xf32> to vector<1x64xf32>
    %671 = vector.broadcast %669 : vector<4x1xf32> to vector<4x64xf32>
    %672 = vector.broadcast %670 : vector<1x64xf32> to vector<4x64xf32>
    %673 = arith.mulf %671, %672 : vector<4x64xf32>
    %674 = vector.extract_strided_slice %0 {offsets = [0, 33], sizes = [4, 1], strides = [1, 1]} : vector<8x56xf32> to vector<4x1xf32>
    %675 = vector.extract_strided_slice %668 {offsets = [1, 0], sizes = [1, 64], strides = [1, 1]} : vector<4x64xf32> to vector<1x64xf32>
    %676 = vector.broadcast %674 : vector<4x1xf32> to vector<4x64xf32>
    %677 = vector.broadcast %675 : vector<1x64xf32> to vector<4x64xf32>
    %678 = arith.mulf %676, %677 : vector<4x64xf32>
    %679 = arith.addf %673, %678 : vector<4x64xf32>
    %680 = vector.extract_strided_slice %0 {offsets = [0, 34], sizes = [4, 1], strides = [1, 1]} : vector<8x56xf32> to vector<4x1xf32>
    %681 = vector.extract_strided_slice %668 {offsets = [2, 0], sizes = [1, 64], strides = [1, 1]} : vector<4x64xf32> to vector<1x64xf32>
    %682 = vector.broadcast %680 : vector<4x1xf32> to vector<4x64xf32>
    %683 = vector.broadcast %681 : vector<1x64xf32> to vector<4x64xf32>
    %684 = arith.mulf %682, %683 : vector<4x64xf32>
    %685 = arith.addf %679, %684 : vector<4x64xf32>
    %686 = vector.extract_strided_slice %0 {offsets = [0, 35], sizes = [4, 1], strides = [1, 1]} : vector<8x56xf32> to vector<4x1xf32>
    %687 = vector.extract_strided_slice %668 {offsets = [3, 0], sizes = [1, 64], strides = [1, 1]} : vector<4x64xf32> to vector<1x64xf32>
    %688 = vector.broadcast %686 : vector<4x1xf32> to vector<4x64xf32>
    %689 = vector.broadcast %687 : vector<1x64xf32> to vector<4x64xf32>
    %690 = arith.mulf %688, %689 : vector<4x64xf32>
    %691 = arith.addf %685, %690 : vector<4x64xf32>
    %692 = arith.addf %667, %691 : vector<4x64xf32>
    %cst_43 = arith.constant dense<0.000000e+00> : vector<4xf32>
    %693 = vector.multi_reduction <add>, %692, %cst_43 [1] : vector<4x64xf32> to vector<4xf32>
    %694 = vector.shape_cast %693 : vector<4xf32> to vector<4x1xf32>
    %695 = arith.mulf %692, %692 : vector<4x64xf32>
    %cst_44 = arith.constant dense<0.000000e+00> : vector<4xf32>
    %696 = vector.multi_reduction <add>, %695, %cst_44 [1] : vector<4x64xf32> to vector<4xf32>
    %697 = vector.shape_cast %696 : vector<4xf32> to vector<4x1xf32>
    %cst_45 = arith.constant 1.562500e-02 : f32
    %698 = vector.broadcast %cst_45 : f32 to vector<4x1xf32>
    %699 = arith.mulf %694, %698 : vector<4x1xf32>
    %cst_46 = arith.constant 1.562500e-02 : f32
    %700 = vector.broadcast %cst_46 : f32 to vector<4x1xf32>
    %701 = arith.mulf %697, %700 : vector<4x1xf32>
    %702 = arith.mulf %699, %699 : vector<4x1xf32>
    %703 = arith.subf %701, %702 : vector<4x1xf32>
    %cst_47 = arith.constant 0.000000e+00 : f32
    %704 = vector.broadcast %cst_47 : f32 to vector<4x1xf32>
    %705 = arith.maximumf %703, %704 : vector<4x1xf32>
    %cst_48 = arith.constant 9.99999974E-6 : f32
    %706 = vector.broadcast %cst_48 : f32 to vector<4x1xf32>
    %707 = arith.addf %705, %706 : vector<4x1xf32>
    %708 = math.rsqrt %707 : vector<4x1xf32>
    %709 = arith.mulf %708, %3 : vector<4x1xf32>
    %710 = arith.mulf %699, %709 : vector<4x1xf32>
    %711 = arith.subf %4, %710 : vector<4x1xf32>
    %712 = vector.broadcast %709 : vector<4x1xf32> to vector<4x64xf32>
    %713 = arith.mulf %692, %712 : vector<4x64xf32>
    %714 = vector.broadcast %711 : vector<4x1xf32> to vector<4x64xf32>
    %715 = arith.addf %713, %714 : vector<4x64xf32>
    %cst_49 = arith.constant 0.00999999977 : f32
    %716 = vector.broadcast %cst_49 : f32 to vector<4x64xf32>
    %717 = arith.mulf %716, %715 : vector<4x64xf32>
    %718 = arith.maximumf %715, %717 : vector<4x64xf32>
    %719 = vector.extract_strided_slice %112 {offsets = [12, 256], sizes = [4, 64], strides = [1, 1]} : vector<16x640xf32> to vector<4x64xf32>
    %720 = vector.extract_strided_slice %112 {offsets = [12, 320], sizes = [4, 64], strides = [1, 1]} : vector<16x640xf32> to vector<4x64xf32>
    %721 = arith.addf %719, %720 : vector<4x64xf32>
    %722 = vector.extract_strided_slice %112 {offsets = [12, 448], sizes = [4, 64], strides = [1, 1]} : vector<16x640xf32> to vector<4x64xf32>
    %723 = arith.addf %721, %722 : vector<4x64xf32>
    %724 = vector.extract_strided_slice %112 {offsets = [12, 512], sizes = [4, 64], strides = [1, 1]} : vector<16x640xf32> to vector<4x64xf32>
    %725 = arith.addf %723, %724 : vector<4x64xf32>
    %cst_50 = arith.constant 2.500000e-01 : f32
    %726 = vector.broadcast %cst_50 : f32 to vector<4x64xf32>
    %727 = arith.mulf %725, %726 : vector<4x64xf32>
    %728 = vector.extract_strided_slice %0 {offsets = [0, 44], sizes = [8, 1], strides = [1, 1]} : vector<8x56xf32> to vector<8x1xf32>
    %729 = vector.extract_strided_slice %727 {offsets = [0, 0], sizes = [1, 64], strides = [1, 1]} : vector<4x64xf32> to vector<1x64xf32>
    %730 = vector.broadcast %728 : vector<8x1xf32> to vector<8x64xf32>
    %731 = vector.broadcast %729 : vector<1x64xf32> to vector<8x64xf32>
    %732 = arith.mulf %730, %731 : vector<8x64xf32>
    %733 = vector.extract_strided_slice %0 {offsets = [0, 45], sizes = [8, 1], strides = [1, 1]} : vector<8x56xf32> to vector<8x1xf32>
    %734 = vector.extract_strided_slice %727 {offsets = [1, 0], sizes = [1, 64], strides = [1, 1]} : vector<4x64xf32> to vector<1x64xf32>
    %735 = vector.broadcast %733 : vector<8x1xf32> to vector<8x64xf32>
    %736 = vector.broadcast %734 : vector<1x64xf32> to vector<8x64xf32>
    %737 = arith.mulf %735, %736 : vector<8x64xf32>
    %738 = arith.addf %732, %737 : vector<8x64xf32>
    %739 = vector.extract_strided_slice %0 {offsets = [0, 46], sizes = [8, 1], strides = [1, 1]} : vector<8x56xf32> to vector<8x1xf32>
    %740 = vector.extract_strided_slice %727 {offsets = [2, 0], sizes = [1, 64], strides = [1, 1]} : vector<4x64xf32> to vector<1x64xf32>
    %741 = vector.broadcast %739 : vector<8x1xf32> to vector<8x64xf32>
    %742 = vector.broadcast %740 : vector<1x64xf32> to vector<8x64xf32>
    %743 = arith.mulf %741, %742 : vector<8x64xf32>
    %744 = arith.addf %738, %743 : vector<8x64xf32>
    %745 = vector.extract_strided_slice %0 {offsets = [0, 47], sizes = [8, 1], strides = [1, 1]} : vector<8x56xf32> to vector<8x1xf32>
    %746 = vector.extract_strided_slice %727 {offsets = [3, 0], sizes = [1, 64], strides = [1, 1]} : vector<4x64xf32> to vector<1x64xf32>
    %747 = vector.broadcast %745 : vector<8x1xf32> to vector<8x64xf32>
    %748 = vector.broadcast %746 : vector<1x64xf32> to vector<8x64xf32>
    %749 = arith.mulf %747, %748 : vector<8x64xf32>
    %750 = arith.addf %744, %749 : vector<8x64xf32>
    %cst_51 = arith.constant dense<0.000000e+00> : vector<8xf32>
    %751 = vector.multi_reduction <add>, %750, %cst_51 [1] : vector<8x64xf32> to vector<8xf32>
    %752 = vector.shape_cast %751 : vector<8xf32> to vector<8x1xf32>
    %753 = arith.mulf %750, %750 : vector<8x64xf32>
    %cst_52 = arith.constant dense<0.000000e+00> : vector<8xf32>
    %754 = vector.multi_reduction <add>, %753, %cst_52 [1] : vector<8x64xf32> to vector<8xf32>
    %755 = vector.shape_cast %754 : vector<8xf32> to vector<8x1xf32>
    %cst_53 = arith.constant 1.562500e-02 : f32
    %756 = vector.broadcast %cst_53 : f32 to vector<8x1xf32>
    %757 = arith.mulf %752, %756 : vector<8x1xf32>
    %cst_54 = arith.constant 1.562500e-02 : f32
    %758 = vector.broadcast %cst_54 : f32 to vector<8x1xf32>
    %759 = arith.mulf %755, %758 : vector<8x1xf32>
    %760 = arith.mulf %757, %757 : vector<8x1xf32>
    %761 = arith.subf %759, %760 : vector<8x1xf32>
    %cst_55 = arith.constant 0.000000e+00 : f32
    %762 = vector.broadcast %cst_55 : f32 to vector<8x1xf32>
    %763 = arith.maximumf %761, %762 : vector<8x1xf32>
    %cst_56 = arith.constant 9.99999974E-6 : f32
    %764 = vector.broadcast %cst_56 : f32 to vector<8x1xf32>
    %765 = arith.addf %763, %764 : vector<8x1xf32>
    %766 = math.rsqrt %765 : vector<8x1xf32>
    %767 = arith.mulf %766, %7 : vector<8x1xf32>
    %768 = arith.mulf %757, %767 : vector<8x1xf32>
    %769 = arith.subf %8, %768 : vector<8x1xf32>
    %770 = vector.broadcast %767 : vector<8x1xf32> to vector<8x64xf32>
    %771 = arith.mulf %750, %770 : vector<8x64xf32>
    %772 = vector.broadcast %769 : vector<8x1xf32> to vector<8x64xf32>
    %773 = arith.addf %771, %772 : vector<8x64xf32>
    %774 = vector.extract_strided_slice %0 {offsets = [0, 40], sizes = [8, 1], strides = [1, 1]} : vector<8x56xf32> to vector<8x1xf32>
    %775 = vector.extract_strided_slice %718 {offsets = [0, 0], sizes = [1, 64], strides = [1, 1]} : vector<4x64xf32> to vector<1x64xf32>
    %776 = vector.broadcast %774 : vector<8x1xf32> to vector<8x64xf32>
    %777 = vector.broadcast %775 : vector<1x64xf32> to vector<8x64xf32>
    %778 = arith.mulf %776, %777 : vector<8x64xf32>
    %779 = vector.extract_strided_slice %0 {offsets = [0, 41], sizes = [8, 1], strides = [1, 1]} : vector<8x56xf32> to vector<8x1xf32>
    %780 = vector.extract_strided_slice %718 {offsets = [1, 0], sizes = [1, 64], strides = [1, 1]} : vector<4x64xf32> to vector<1x64xf32>
    %781 = vector.broadcast %779 : vector<8x1xf32> to vector<8x64xf32>
    %782 = vector.broadcast %780 : vector<1x64xf32> to vector<8x64xf32>
    %783 = arith.mulf %781, %782 : vector<8x64xf32>
    %784 = arith.addf %778, %783 : vector<8x64xf32>
    %785 = vector.extract_strided_slice %0 {offsets = [0, 42], sizes = [8, 1], strides = [1, 1]} : vector<8x56xf32> to vector<8x1xf32>
    %786 = vector.extract_strided_slice %718 {offsets = [2, 0], sizes = [1, 64], strides = [1, 1]} : vector<4x64xf32> to vector<1x64xf32>
    %787 = vector.broadcast %785 : vector<8x1xf32> to vector<8x64xf32>
    %788 = vector.broadcast %786 : vector<1x64xf32> to vector<8x64xf32>
    %789 = arith.mulf %787, %788 : vector<8x64xf32>
    %790 = arith.addf %784, %789 : vector<8x64xf32>
    %791 = vector.extract_strided_slice %0 {offsets = [0, 43], sizes = [8, 1], strides = [1, 1]} : vector<8x56xf32> to vector<8x1xf32>
    %792 = vector.extract_strided_slice %718 {offsets = [3, 0], sizes = [1, 64], strides = [1, 1]} : vector<4x64xf32> to vector<1x64xf32>
    %793 = vector.broadcast %791 : vector<8x1xf32> to vector<8x64xf32>
    %794 = vector.broadcast %792 : vector<1x64xf32> to vector<8x64xf32>
    %795 = arith.mulf %793, %794 : vector<8x64xf32>
    %796 = arith.addf %790, %795 : vector<8x64xf32>
    %cst_57 = arith.constant dense<0.000000e+00> : vector<8xf32>
    %797 = vector.multi_reduction <add>, %796, %cst_57 [1] : vector<8x64xf32> to vector<8xf32>
    %798 = vector.shape_cast %797 : vector<8xf32> to vector<8x1xf32>
    %799 = arith.mulf %796, %796 : vector<8x64xf32>
    %cst_58 = arith.constant dense<0.000000e+00> : vector<8xf32>
    %800 = vector.multi_reduction <add>, %799, %cst_58 [1] : vector<8x64xf32> to vector<8xf32>
    %801 = vector.shape_cast %800 : vector<8xf32> to vector<8x1xf32>
    %cst_59 = arith.constant 1.562500e-02 : f32
    %802 = vector.broadcast %cst_59 : f32 to vector<8x1xf32>
    %803 = arith.mulf %798, %802 : vector<8x1xf32>
    %cst_60 = arith.constant 1.562500e-02 : f32
    %804 = vector.broadcast %cst_60 : f32 to vector<8x1xf32>
    %805 = arith.mulf %801, %804 : vector<8x1xf32>
    %806 = arith.mulf %803, %803 : vector<8x1xf32>
    %807 = arith.subf %805, %806 : vector<8x1xf32>
    %cst_61 = arith.constant 0.000000e+00 : f32
    %808 = vector.broadcast %cst_61 : f32 to vector<8x1xf32>
    %809 = arith.maximumf %807, %808 : vector<8x1xf32>
    %cst_62 = arith.constant 9.99999974E-6 : f32
    %810 = vector.broadcast %cst_62 : f32 to vector<8x1xf32>
    %811 = arith.addf %809, %810 : vector<8x1xf32>
    %812 = math.rsqrt %811 : vector<8x1xf32>
    %813 = arith.mulf %812, %5 : vector<8x1xf32>
    %814 = arith.mulf %803, %813 : vector<8x1xf32>
    %815 = arith.subf %6, %814 : vector<8x1xf32>
    %816 = vector.broadcast %813 : vector<8x1xf32> to vector<8x64xf32>
    %817 = arith.mulf %796, %816 : vector<8x64xf32>
    %818 = vector.broadcast %815 : vector<8x1xf32> to vector<8x64xf32>
    %819 = arith.addf %817, %818 : vector<8x64xf32>
    %820 = arith.addf %819, %773 : vector<8x64xf32>
    %cst_63 = arith.constant 0.00999999977 : f32
    %821 = vector.broadcast %cst_63 : f32 to vector<8x64xf32>
    %822 = arith.mulf %821, %820 : vector<8x64xf32>
    %823 = arith.maximumf %820, %822 : vector<8x64xf32>
    %c8 = arith.constant 8 : index
    %c0_64 = arith.constant 0 : index
    %824 = vector.load %arg4[%c8, %c0_64] : memref<16x64xf32, #tpu.memory_space<vmem>>, vector<8x64xf32>
    tpu.vector_store %arg4[%c8, %c0_64], %823 {strides = array<i32>} : memref<16x64xf32, #tpu.memory_space<vmem>>, vector<8x64xf32>,
    return
  }
  func.func @transform_0(%arg0: i32) -> (i32, i32) {
    %c0_i32 = arith.constant 0 : i32
    %c0_i32_0 = arith.constant 0 : i32
    %c0_i32_1 = arith.constant 0 : i32
    return %c0_i32, %c0_i32_0 : i32, i32
  }
  func.func @transform_1(%arg0: i32) -> (i32, i32) {
    %c0_i32 = arith.constant 0 : i32
    %c0_i32_0 = arith.constant 0 : i32
    %c0_i32_1 = arith.constant 0 : i32
    return %c0_i32, %c0_i32_0 : i32, i32
  }
  func.func @transform_2(%arg0: i32) -> (i32, i32) {
    %c0_i32 = arith.constant 0 : i32
    %c0_i32_0 = arith.constant 0 : i32
    %c0_i32_1 = arith.constant 0 : i32
    return %c0_i32, %c0_i32_0 : i32, i32
  }
  func.func @transform_3(%arg0: i32) -> (i32, i32) {
    %c0_i32 = arith.constant 0 : i32
    %c0_i32_0 = arith.constant 0 : i32
    %c0_i32_1 = arith.constant 0 : i32
    return %c0_i32, %c0_i32_0 : i32, i32
  }
}

</mosaic_0001>

<llo_original>
// kernel: bottleneck_d_forward.1
$region0: #{bottleneck_d_forward.1}
  #allocation0 [shape = 'u32[]', space=smem, size = 0x4, offset = 0x4, fixed_abs, tag = 'smem constant byte address 0x4 - core index']
  #allocation1 [shape = 'u32[144,128]{1,0:T(1,128)}', space=vmem, size = 0x12000, scoped, tag = 'internal scratch']
  %s0 = inlined_call_operand.vmem [shape: f32[8,256], index: 0, kind: input, shape index: {}]
  %s1 = inlined_call_operand.vmem [shape: bf16[256,640], index: 1, kind: input, shape index: {}]
  %s2 = inlined_call_operand.vmem [shape: f32[8,56], index: 2, kind: input, shape index: {}]
  %s3 = inlined_call_operand.vmem [shape: f32[16,64], index: 3, kind: output, shape index: {}]
  %s4 = sld [smem:[#allocation0]]
  $region22: #{bottleneck_d_forward.1} parent=0
    _
  %s6 = ssub.s32 1, %s4
  %s7 = scalar_select 0, %s6, %s4
  // Predicated region
  $region2: #{bottleneck_d_forward.1} parent=0 // pred_check
    _
  $region3: #{bottleneck_d_forward.1} parent=0 // pred_check_branch
    %9 = sbr.rel (0) target = $region5
  $region4: #{bottleneck_d_forward.1} parent=0 // pred_region
    _
  $region5: #{bottleneck_d_forward.1} parent=0 // pred_fallthru
    _
  // Predicated region
  $region6: #{bottleneck_d_forward.1} parent=0 // pred_check
    _
  $region7: #{bottleneck_d_forward.1} parent=0 // pred_check_branch
    %11 = sbr.rel (0) target = $region9
  $region8: #{bottleneck_d_forward.1} parent=0 // pred_region
    _
  $region9: #{bottleneck_d_forward.1} parent=0 // pred_fallthru
    _
  // Predicated region
  $region10: #{bottleneck_d_forward.1} parent=0 // pred_check
    _
  $region11: #{bottleneck_d_forward.1} parent=0 // pred_check_branch
    %13 = sbr.rel (0) target = $region13
  $region12: #{bottleneck_d_forward.1} parent=0 // pred_region
    _
  $region13: #{bottleneck_d_forward.1} parent=0 // pred_fallthru
    _
  %v15 = vld [vmem:[%s2] sm:$0xff]
  %v16 = vld [vmem:[%s0] sm:$0xf]
  %v17 = vld [vmem:[%s0 + $0x8] sm:$0xf]
  %19 = vset.pattern.permute.xlu0 36
  %20 = vperm.xlu0 %19, %v15
  %v21 = vpop.permute.xlu0 %20
  %v23 = vlaneseq
  %v24 = vshrl.u32 %v23, 7
  %v25 = vsub.s32 0, %v24
  %v26 = vrot.slane %v16, %v25
  %v27 = vlaneseq
  %v28 = vshrl.u32 %v27, 7
  %v29 = vsub.s32 0, %v28
  %v30 = vrot.slane %v17, %v29
  %v31 = vmul.f32 %v21, %v26
  %v32 = vmul.f32 %v21, %v30
  %33 = vset.pattern.permute.xlu0 37
  %34 = vperm.xlu0 %33, %v15
  %v35 = vpop.permute.xlu0 %34
  %v37 = vlaneseq
  %v38 = vshrl.u32 %v37, 7
  %v39 = vsub.s32 1, %v38
  %v40 = vrot.slane %v16, %v39
  %v41 = vlaneseq
  %v42 = vshrl.u32 %v41, 7
  %v43 = vsub.s32 1, %v42
  %v44 = vrot.slane %v17, %v43
  %v45 = vmul.f32 %v35, %v40
  %v46 = vmul.f32 %v35, %v44
  %v47 = vadd.f32 %v31, %v45
  %v48 = vadd.f32 %v32, %v46
  %49 = vset.pattern.permute.xlu0 38
  %50 = vperm.xlu0 %49, %v15
  %v51 = vpop.permute.xlu0 %50
  %v53 = vlaneseq
  %v54 = vshrl.u32 %v53, 7
  %v55 = vsub.s32 2, %v54
  %v56 = vrot.slane %v16, %v55
  %v57 = vlaneseq
  %v58 = vshrl.u32 %v57, 7
  %v59 = vsub.s32 2, %v58
  %v60 = vrot.slane %v17, %v59
  %v61 = vmul.f32 %v51, %v56
  %v62 = vmul.f32 %v51, %v60
  %v63 = vadd.f32 %v47, %v61
  %v64 = vadd.f32 %v48, %v62
  %65 = vset.pattern.permute.xlu0 39
  %66 = vperm.xlu0 %65, %v15
  %v67 = vpop.permute.xlu0 %66
  %v69 = vlaneseq
  %v70 = vshrl.u32 %v69, 7
  %v71 = vsub.s32 3, %v70
  %v72 = vrot.slane %v16, %v71
  %v73 = vlaneseq
  %v74 = vshrl.u32 %v73, 7
  %v75 = vsub.s32 3, %v74
  %v76 = vrot.slane %v17, %v75
  %v77 = vmul.f32 %v67, %v72
  %v78 = vmul.f32 %v67, %v76
  %v79 = vadd.f32 %v63, %v77
  %v80 = vadd.f32 %v64, %v78
  %vm81 = vcmask 1043456
  %v82 = vsel %vm81, %v79, 0.0
  %v83 = vsel %vm81, %v80, 0.0
  %v84 = vadd.f32 %v82, %v83
  %85 = vadd.xlane.f32.xlu0 %v84
  %v86 = vpop.xlane.xlu0 %85
  %v87 = vmul.f32 %v79, %v79
  %v88 = vmul.f32 %v80, %v80
  %v89 = vsel %vm81, %v87, 0.0
  %v90 = vsel %vm81, %v88, 0.0
  %v91 = vadd.f32 %v89, %v90
  %92 = vadd.xlane.f32.xlu0 %v91
  %v93 = vpop.xlane.xlu0 %92
  %v94 = vmul.f32 %v86, 0.00390625
  %v95 = vmul.f32 %v93, 0.00390625
  %v96 = vmul.f32 %v94, %v94
  %v97 = vsub.f32 %v95, %v96
  %v98 = vmax.f32 %v97, 0.0
  %v99 = vadd.f32 %v98, 1e-05
  %v100 = vrsqrt.pop %v99
  %v101 = vmul.f32 %v100, %v15
  %v102 = vmul.f32 %v94, %v101
  %104 = vrot.lane.b32.xlu0 %v102, 1
  %v105 = vpop.permute.xlu0 %104
  %v107 = vsub.f32 %v15, %v105
  %109 = vset.pattern.permute.xlu0 48
  %110 = vperm.xlu0 %109, %v101
  %v111 = vpop.permute.xlu0 %110
  %v113 = vmul.f32 %v79, %v111
  %v114 = vmul.f32 %v80, %v111
  %116 = vset.pattern.permute.xlu0 49
  %117 = vperm.xlu0 %116, %v107
  %v118 = vpop.permute.xlu0 %117
  %v120 = vadd.f32 %v113, %v118
  %v121 = vadd.f32 %v114, %v118
  %v122 = vmul.f32 %v120, 0.01
  %v123 = vmul.f32 %v121, 0.01
  %v124 = vmax.f32 %v120, %v122
  %v125 = vmax.f32 %v121, %v123
  %v126 = vld [vmem:[%s0] sm:$0xf0]
  %v127 = vld [vmem:[%s0 + $0x8] sm:$0xf0]
  %v128 = vlaneseq
  %v129 = vshrl.u32 %v128, 7
  %v130 = vsub.s32 4, %v129
  %v131 = vrot.slane %v126, %v130
  %v132 = vlaneseq
  %v133 = vshrl.u32 %v132, 7
  %v134 = vsub.s32 4, %v133
  %v135 = vrot.slane %v127, %v134
  %v136 = vmul.f32 %v21, %v131
  %v137 = vmul.f32 %v21, %v135
  %v138 = vlaneseq
  %v139 = vshrl.u32 %v138, 7
  %v140 = vsub.s32 5, %v139
  %v141 = vrot.slane %v126, %v140
  %v142 = vlaneseq
  %v143 = vshrl.u32 %v142, 7
  %v144 = vsub.s32 5, %v143
  %v145 = vrot.slane %v127, %v144
  %v146 = vmul.f32 %v35, %v141
  %v147 = vmul.f32 %v35, %v145
  %v148 = vadd.f32 %v136, %v146
  %v149 = vadd.f32 %v137, %v147
  %v150 = vlaneseq
  %v151 = vshrl.u32 %v150, 7
  %v152 = vsub.s32 6, %v151
  %v153 = vrot.slane %v126, %v152
  %v154 = vlaneseq
  %v155 = vshrl.u32 %v154, 7
  %v156 = vsub.s32 6, %v155
  %v157 = vrot.slane %v127, %v156
  %v158 = vmul.f32 %v51, %v153
  %v159 = vmul.f32 %v51, %v157
  %v160 = vadd.f32 %v148, %v158
  %v161 = vadd.f32 %v149, %v159
  %v162 = vlaneseq
  %v163 = vshrl.u32 %v162, 7
  %v164 = vsub.s32 7, %v163
  %v165 = vrot.slane %v126, %v164
  %v166 = vlaneseq
  %v167 = vshrl.u32 %v166, 7
  %v168 = vsub.s32 7, %v167
  %v169 = vrot.slane %v127, %v168
  %v170 = vmul.f32 %v67, %v165
  %v171 = vmul.f32 %v67, %v169
  %v172 = vadd.f32 %v160, %v170
  %v173 = vadd.f32 %v161, %v171
  %v174 = vsel %vm81, %v172, 0.0
  %v175 = vsel %vm81, %v173, 0.0
  %v176 = vadd.f32 %v174, %v175
  %177 = vadd.xlane.f32.xlu0 %v176
  %v178 = vpop.xlane.xlu0 %177
  %v179 = vmul.f32 %v172, %v172
  %v180 = vmul.f32 %v173, %v173
  %v181 = vsel %vm81, %v179, 0.0
  %v182 = vsel %vm81, %v180, 0.0
  %v183 = vadd.f32 %v181, %v182
  %184 = vadd.xlane.f32.xlu0 %v183
  %v185 = vpop.xlane.xlu0 %184
  %v186 = vmul.f32 %v178, 0.00390625
  %v187 = vmul.f32 %v185, 0.00390625
  %v188 = vmul.f32 %v186, %v186
  %v189 = vsub.f32 %v187, %v188
  %v190 = vmax.f32 %v189, 0.0
  %v191 = vadd.f32 %v190, 1e-05
  %v192 = vrsqrt.pop %v191
  %v193 = vmul.f32 %v192, %v15
  %v194 = vmul.f32 %v186, %v193
  %196 = vrot.lane.b32.xlu0 %v194, 1
  %v197 = vpop.permute.xlu0 %196
  %v199 = vsub.f32 %v15, %v197
  %201 = vset.pattern.permute.xlu0 48
  %202 = vperm.xlu0 %201, %v193
  %v203 = vpop.permute.xlu0 %202
  %v205 = vmul.f32 %v172, %v203
  %v206 = vmul.f32 %v173, %v203
  %208 = vset.pattern.permute.xlu0 49
  %209 = vperm.xlu0 %208, %v199
  %v210 = vpop.permute.xlu0 %209
  %v212 = vadd.f32 %v205, %v210
  %v213 = vadd.f32 %v206, %v210
  %v214 = vmul.f32 %v212, 0.01
  %v215 = vmul.f32 %v213, 0.01
  %v216 = vmax.f32 %v212, %v214
  %v217 = vmax.f32 %v213, %v215
  %v220 = vrot.slane %v16, 4
  %v221 = vrot.slane %v17, 4
  %v224 = vsel %vm81, %v124, %v220
  %v225 = vsel %vm81, %v125, %v221
  %v226 = vsel %vm81, %v216, %v126
  %v227 = vsel %vm81, %v217, %v127
  %v228 = vpack.c.bf16 %v226, %v224
  %v229 = vpack.c.bf16 %v227, %v225
  %v230 = vld [vmem:[%s1] sm:$0xff]
  %v231 = vld [vmem:[%s1 + $0x8] sm:$0xff]
  %v232 = vld [vmem:[%s1 + $0x10] sm:$0xf]
  %v233 = vld [vmem:[%s1 + $0x14] sm:$0xff]
  %v234 = vld [vmem:[%s1 + $0x1c] sm:$0xff]
  %v235 = vld [vmem:[%s1 + $0x24] sm:$0xf]
  %v236 = vld [vmem:[%s1 + $0x28] sm:$0xff]
  %v237 = vld [vmem:[%s1 + $0x30] sm:$0xff]
  %v238 = vld [vmem:[%s1 + $0x38] sm:$0xf]
  %v239 = vld [vmem:[%s1 + $0x3c] sm:$0xff]
  %v240 = vld [vmem:[%s1 + $0x44] sm:$0xff]
  %v241 = vld [vmem:[%s1 + $0x4c] sm:$0xf]
  %v242 = vld [vmem:[%s1 + $0x50] sm:$0xff]
  %v243 = vld [vmem:[%s1 + $0x58] sm:$0xff]
  %v244 = vld [vmem:[%s1 + $0x60] sm:$0xf]
  %v245 = vld [vmem:[%s1 + $0x64] sm:$0xff]
  %v246 = vld [vmem:[%s1 + $0x6c] sm:$0xff]
  %v247 = vld [vmem:[%s1 + $0x74] sm:$0xf]
  %v248 = vld [vmem:[%s1 + $0x78] sm:$0xff]
  %v249 = vld [vmem:[%s1 + $0x80] sm:$0xff]
  %v250 = vld [vmem:[%s1 + $0x88] sm:$0xf]
  %v251 = vld [vmem:[%s1 + $0x8c] sm:$0xff]
  %v252 = vld [vmem:[%s1 + $0x94] sm:$0xff]
  %v253 = vld [vmem:[%s1 + $0x9c] sm:$0xf]
  %v254 = vld [vmem:[%s1 + $0xa0] sm:$0xff]
  %v255 = vld [vmem:[%s1 + $0xa8] sm:$0xff]
  %v256 = vld [vmem:[%s1 + $0xb0] sm:$0xf]
  %v257 = vld [vmem:[%s1 + $0xb4] sm:$0xff]
  %v258 = vld [vmem:[%s1 + $0xbc] sm:$0xff]
  %v259 = vld [vmem:[%s1 + $0xc4] sm:$0xf]
  %v260 = vld [vmem:[%s1 + $0xc8] sm:$0xff]
  %v261 = vld [vmem:[%s1 + $0xd0] sm:$0xff]
  %v262 = vld [vmem:[%s1 + $0xd8] sm:$0xf]
  %v263 = vld [vmem:[%s1 + $0xdc] sm:$0xff]
  %v264 = vld [vmem:[%s1 + $0xe4] sm:$0xff]
  %v265 = vld [vmem:[%s1 + $0xec] sm:$0xf]
  %v266 = vld [vmem:[%s1 + $0xf0] sm:$0xff]
  %v267 = vld [vmem:[%s1 + $0xf8] sm:$0xff]
  %v268 = vld [vmem:[%s1 + $0x100] sm:$0xf]
  %v269 = vld [vmem:[%s1 + $0x104] sm:$0xff]
  %v270 = vld [vmem:[%s1 + $0x10c] sm:$0xff]
  %v271 = vld [vmem:[%s1 + $0x114] sm:$0xf]
  %v272 = vld [vmem:[%s1 + $0x118] sm:$0xff]
  %v273 = vld [vmem:[%s1 + $0x120] sm:$0xff]
  %v274 = vld [vmem:[%s1 + $0x128] sm:$0xf]
  %v275 = vld [vmem:[%s1 + $0x12c] sm:$0xff]
  %v276 = vld [vmem:[%s1 + $0x134] sm:$0xff]
  %v277 = vld [vmem:[%s1 + $0x13c] sm:$0xf]
  %v278 = vld [vmem:[%s1 + $0x140] sm:$0xff]
  %v279 = vld [vmem:[%s1 + $0x148] sm:$0xff]
  %v280 = vld [vmem:[%s1 + $0x150] sm:$0xf]
  %v281 = vld [vmem:[%s1 + $0x154] sm:$0xff]
  %v282 = vld [vmem:[%s1 + $0x15c] sm:$0xff]
  %v283 = vld [vmem:[%s1 + $0x164] sm:$0xf]
  %v284 = vld [vmem:[%s1 + $0x168] sm:$0xff]
  %v285 = vld [vmem:[%s1 + $0x170] sm:$0xff]
  %v286 = vld [vmem:[%s1 + $0x178] sm:$0xf]
  %v287 = vld [vmem:[%s1 + $0x17c] sm:$0xff]
  %v288 = vld [vmem:[%s1 + $0x184] sm:$0xff]
  %v289 = vld [vmem:[%s1 + $0x18c] sm:$0xf]
  %v290 = vld [vmem:[%s1 + $0x190] sm:$0xff]
  %v291 = vld [vmem:[%s1 + $0x198] sm:$0xff]
  %v292 = vld [vmem:[%s1 + $0x1a0] sm:$0xf]
  %v293 = vld [vmem:[%s1 + $0x1a4] sm:$0xff]
  %v294 = vld [vmem:[%s1 + $0x1ac] sm:$0xff]
  %v295 = vld [vmem:[%s1 + $0x1b4] sm:$0xf]
  %v296 = vld [vmem:[%s1 + $0x1b8] sm:$0xff]
  %v297 = vld [vmem:[%s1 + $0x1c0] sm:$0xff]
  %v298 = vld [vmem:[%s1 + $0x1c8] sm:$0xf]
  %v299 = vld [vmem:[%s1 + $0x1cc] sm:$0xff]
  %v300 = vld [vmem:[%s1 + $0x1d4] sm:$0xff]
  %v301 = vld [vmem:[%s1 + $0x1dc] sm:$0xf]
  %v302 = vld [vmem:[%s1 + $0x1e0] sm:$0xff]
  %v303 = vld [vmem:[%s1 + $0x1e8] sm:$0xff]
  %v304 = vld [vmem:[%s1 + $0x1f0] sm:$0xf]
  %v305 = vld [vmem:[%s1 + $0x1f4] sm:$0xff]
  %v306 = vld [vmem:[%s1 + $0x1fc] sm:$0xff]
  %v307 = vld [vmem:[%s1 + $0x204] sm:$0xf]
  %v308 = vld [vmem:[%s1 + $0x208] sm:$0xff]
  %v309 = vld [vmem:[%s1 + $0x210] sm:$0xff]
  %v310 = vld [vmem:[%s1 + $0x218] sm:$0xf]
  %v311 = vld [vmem:[%s1 + $0x21c] sm:$0xff]
  %v312 = vld [vmem:[%s1 + $0x224] sm:$0xff]
  %v313 = vld [vmem:[%s1 + $0x22c] sm:$0xf]
  %v314 = vld [vmem:[%s1 + $0x230] sm:$0xff]
  %v315 = vld [vmem:[%s1 + $0x238] sm:$0xff]
  %v316 = vld [vmem:[%s1 + $0x240] sm:$0xf]
  %v317 = vld [vmem:[%s1 + $0x244] sm:$0xff]
  %v318 = vld [vmem:[%s1 + $0x24c] sm:$0xff]
  %v319 = vld [vmem:[%s1 + $0x254] sm:$0xf]
  %v320 = vld [vmem:[%s1 + $0x258] sm:$0xff]
  %v321 = vld [vmem:[%s1 + $0x260] sm:$0xff]
  %v322 = vld [vmem:[%s1 + $0x268] sm:$0xf]
  %v323 = vld [vmem:[%s1 + $0x26c] sm:$0xff]
  %v324 = vld [vmem:[%s1 + $0x274] sm:$0xff]
  %v325 = vld [vmem:[%s1 + $0x27c] sm:$0xf]
  %v422 = vunpack.c.l.b16 %v230
  %v423 = vunpack.c.h.b16 %v230
  %v424 = vunpack.c.l.b16 %v231
  %v425 = vunpack.c.h.b16 %v231
  %v426 = vunpack.c.l.b16 %v232
  %v427 = vunpack.c.l.b16 %v233
  %v428 = vunpack.c.h.b16 %v233
  %v429 = vunpack.c.l.b16 %v234
  %v430 = vunpack.c.h.b16 %v234
  %v431 = vunpack.c.l.b16 %v235
  %v432 = vunpack.c.l.b16 %v236
  %v433 = vunpack.c.h.b16 %v236
  %v434 = vunpack.c.l.b16 %v237
  %v435 = vunpack.c.h.b16 %v237
  %v436 = vunpack.c.l.b16 %v238
  %v437 = vunpack.c.l.b16 %v239
  %v438 = vunpack.c.h.b16 %v239
  %v439 = vunpack.c.l.b16 %v240
  %v440 = vunpack.c.h.b16 %v240
  %v441 = vunpack.c.l.b16 %v241
  %v442 = vunpack.c.l.b16 %v242
  %v443 = vunpack.c.h.b16 %v242
  %v444 = vunpack.c.l.b16 %v243
  %v445 = vunpack.c.h.b16 %v243
  %v446 = vunpack.c.l.b16 %v244
  %v447 = vunpack.c.l.b16 %v245
  %v448 = vunpack.c.h.b16 %v245
  %v449 = vunpack.c.l.b16 %v246
  %v450 = vunpack.c.h.b16 %v246
  %v451 = vunpack.c.l.b16 %v247
  %v452 = vunpack.c.l.b16 %v248
  %v453 = vunpack.c.h.b16 %v248
  %v454 = vunpack.c.l.b16 %v249
  %v455 = vunpack.c.h.b16 %v249
  %v456 = vunpack.c.l.b16 %v250
  %v457 = vunpack.c.l.b16 %v251
  %v458 = vunpack.c.h.b16 %v251
  %v459 = vunpack.c.l.b16 %v252
  %v460 = vunpack.c.h.b16 %v252
  %v461 = vunpack.c.l.b16 %v253
  %v462 = vunpack.c.l.b16 %v254
  %v463 = vunpack.c.h.b16 %v254
  %v464 = vunpack.c.l.b16 %v255
  %v465 = vunpack.c.h.b16 %v255
  %v466 = vunpack.c.l.b16 %v256
  %v467 = vunpack.c.l.b16 %v257
  %v468 = vunpack.c.h.b16 %v257
  %v469 = vunpack.c.l.b16 %v258
  %v470 = vunpack.c.h.b16 %v258
  %v471 = vunpack.c.l.b16 %v259
  %v472 = vunpack.c.l.b16 %v260
  %v473 = vunpack.c.h.b16 %v260
  %v474 = vunpack.c.l.b16 %v261
  %v475 = vunpack.c.h.b16 %v261
  %v476 = vunpack.c.l.b16 %v262
  %v477 = vunpack.c.l.b16 %v263
  %v478 = vunpack.c.h.b16 %v263
  %v479 = vunpack.c.l.b16 %v264
  %v480 = vunpack.c.h.b16 %v264
  %v481 = vunpack.c.l.b16 %v265
  %v482 = vunpack.c.l.b16 %v266
  %v483 = vunpack.c.h.b16 %v266
  %v484 = vunpack.c.l.b16 %v267
  %v485 = vunpack.c.h.b16 %v267
  %v486 = vunpack.c.l.b16 %v268
  %v487 = vunpack.c.l.b16 %v269
  %v488 = vunpack.c.h.b16 %v269
  %v489 = vunpack.c.l.b16 %v270
  %v490 = vunpack.c.h.b16 %v270
  %v491 = vunpack.c.l.b16 %v271
  %v492 = vunpack.c.l.b16 %v272
  %v493 = vunpack.c.h.b16 %v272
  %v494 = vunpack.c.l.b16 %v273
  %v495 = vunpack.c.h.b16 %v273
  %v496 = vunpack.c.l.b16 %v274
  %v497 = vunpack.c.l.b16 %v275
  %v498 = vunpack.c.h.b16 %v275
  %v499 = vunpack.c.l.b16 %v276
  %v500 = vunpack.c.h.b16 %v276
  %v501 = vunpack.c.l.b16 %v277
  %v502 = vunpack.c.l.b16 %v278
  %v503 = vunpack.c.h.b16 %v278
  %v504 = vunpack.c.l.b16 %v279
  %v505 = vunpack.c.h.b16 %v279
  %v506 = vunpack.c.l.b16 %v280
  %v507 = vunpack.c.l.b16 %v281
  %v508 = vunpack.c.h.b16 %v281
  %v509 = vunpack.c.l.b16 %v282
  %v510 = vunpack.c.h.b16 %v282
  %v511 = vunpack.c.l.b16 %v283
  %v512 = vunpack.c.l.b16 %v284
  %v513 = vunpack.c.h.b16 %v284
  %v514 = vunpack.c.l.b16 %v285
  %v515 = vunpack.c.h.b16 %v285
  %v516 = vunpack.c.l.b16 %v286
  %v517 = vunpack.c.l.b16 %v287
  %v518 = vunpack.c.h.b16 %v287
  %v519 = vunpack.c.l.b16 %v288
  %v520 = vunpack.c.h.b16 %v288
  %v521 = vunpack.c.l.b16 %v289
  %v522 = vunpack.c.l.b16 %v290
  %v523 = vunpack.c.h.b16 %v290
  %v524 = vunpack.c.l.b16 %v291
  %v525 = vunpack.c.h.b16 %v291
  %v526 = vunpack.c.l.b16 %v292
  %v527 = vunpack.c.l.b16 %v293
  %v528 = vunpack.c.h.b16 %v293
  %v529 = vunpack.c.l.b16 %v294
  %v530 = vunpack.c.h.b16 %v294
  %v531 = vunpack.c.l.b16 %v295
  %v532 = vunpack.c.l.b16 %v296
  %v533 = vunpack.c.h.b16 %v296
  %v534 = vunpack.c.l.b16 %v297
  %v535 = vunpack.c.h.b16 %v297
  %v536 = vunpack.c.l.b16 %v298
  %v537 = vunpack.c.l.b16 %v299
  %v538 = vunpack.c.h.b16 %v299
  %v539 = vunpack.c.l.b16 %v300
  %v540 = vunpack.c.h.b16 %v300
  %v541 = vunpack.c.l.b16 %v301
  %v542 = vunpack.c.l.b16 %v302
  %v543 = vunpack.c.h.b16 %v302
  %v544 = vunpack.c.l.b16 %v303
  %v545 = vunpack.c.h.b16 %v303
  %v546 = vunpack.c.l.b16 %v304
  %v547 = vunpack.c.l.b16 %v305
  %v548 = vunpack.c.h.b16 %v305
  %v549 = vunpack.c.l.b16 %v306
  %v550 = vunpack.c.h.b16 %v306
  %v551 = vunpack.c.l.b16 %v307
  %v552 = vunpack.c.l.b16 %v308
  %v553 = vunpack.c.h.b16 %v308
  %v554 = vunpack.c.l.b16 %v309
  %v555 = vunpack.c.h.b16 %v309
  %v556 = vunpack.c.l.b16 %v310
  %v557 = vunpack.c.l.b16 %v311
  %v558 = vunpack.c.h.b16 %v311
  %v559 = vunpack.c.l.b16 %v312
  %v560 = vunpack.c.h.b16 %v312
  %v561 = vunpack.c.l.b16 %v313
  %v562 = vunpack.c.l.b16 %v314
  %v563 = vunpack.c.h.b16 %v314
  %v564 = vunpack.c.l.b16 %v315
  %v565 = vunpack.c.h.b16 %v315
  %v566 = vunpack.c.l.b16 %v316
  %v567 = vunpack.c.l.b16 %v317
  %v568 = vunpack.c.h.b16 %v317
  %v569 = vunpack.c.l.b16 %v318
  %v570 = vunpack.c.h.b16 %v318
  %v571 = vunpack.c.l.b16 %v319
  %v572 = vunpack.c.l.b16 %v320
  %v573 = vunpack.c.h.b16 %v320
  %v574 = vunpack.c.l.b16 %v321
  %v575 = vunpack.c.h.b16 %v321
  %v576 = vunpack.c.l.b16 %v322
  %v577 = vunpack.c.l.b16 %v323
  %v578 = vunpack.c.h.b16 %v323
  %v579 = vunpack.c.l.b16 %v324
  %v580 = vunpack.c.h.b16 %v324
  %v581 = vunpack.c.l.b16 %v325
  %v582 = vpack.c.b16 %v427, %v422
  %v583 = vpack.c.b16 %v428, %v423
  %v584 = vpack.c.b16 %v429, %v424
  %v585 = vpack.c.b16 %v430, %v425
  %v586 = vpack.c.b16 %v431, %v426
  %v587 = vpack.c.b16 %v437, %v432
  %v588 = vpack.c.b16 %v438, %v433
  %v589 = vpack.c.b16 %v439, %v434
  %v590 = vpack.c.b16 %v440, %v435
  %v591 = vpack.c.b16 %v441, %v436
  %v592 = vpack.c.b16 %v447, %v442
  %v593 = vpack.c.b16 %v448, %v443
  %v594 = vpack.c.b16 %v449, %v444
  %v595 = vpack.c.b16 %v450, %v445
  %v596 = vpack.c.b16 %v451, %v446
  %v597 = vpack.c.b16 %v457, %v452
  %v598 = vpack.c.b16 %v458, %v453
  %v599 = vpack.c.b16 %v459, %v454
  %v600 = vpack.c.b16 %v460, %v455
  %v601 = vpack.c.b16 %v461, %v456
  %v602 = vpack.c.b16 %v467, %v462
  %v603 = vpack.c.b16 %v468, %v463
  %v604 = vpack.c.b16 %v469, %v464
  %v605 = vpack.c.b16 %v470, %v465
  %v606 = vpack.c.b16 %v471, %v466
  %v607 = vpack.c.b16 %v477, %v472
  %v608 = vpack.c.b16 %v478, %v473
  %v609 = vpack.c.b16 %v479, %v474
  %v610 = vpack.c.b16 %v480, %v475
  %v611 = vpack.c.b16 %v481, %v476
  %v612 = vpack.c.b16 %v487, %v482
  %v613 = vpack.c.b16 %v488, %v483
  %v614 = vpack.c.b16 %v489, %v484
  %v615 = vpack.c.b16 %v490, %v485
  %v616 = vpack.c.b16 %v491, %v486
  %v617 = vpack.c.b16 %v497, %v492
  %v618 = vpack.c.b16 %v498, %v493
  %v619 = vpack.c.b16 %v499, %v494
  %v620 = vpack.c.b16 %v500, %v495
  %v621 = vpack.c.b16 %v501, %v496
  %v622 = vpack.c.b16 %v507, %v502
  %v623 = vpack.c.b16 %v508, %v503
  %v624 = vpack.c.b16 %v509, %v504
  %v625 = vpack.c.b16 %v510, %v505
  %v626 = vpack.c.b16 %v511, %v506
  %v627 = vpack.c.b16 %v517, %v512
  %v628 = vpack.c.b16 %v518, %v513
  %v629 = vpack.c.b16 %v519, %v514
  %v630 = vpack.c.b16 %v520, %v515
  %v631 = vpack.c.b16 %v521, %v516
  %v632 = vpack.c.b16 %v527, %v522
  %v633 = vpack.c.b16 %v528, %v523
  %v634 = vpack.c.b16 %v529, %v524
  %v635 = vpack.c.b16 %v530, %v525
  %v636 = vpack.c.b16 %v531, %v526
  %v637 = vpack.c.b16 %v537, %v532
  %v638 = vpack.c.b16 %v538, %v533
  %v639 = vpack.c.b16 %v539, %v534
  %v640 = vpack.c.b16 %v540, %v535
  %v641 = vpack.c.b16 %v541, %v536
  %v642 = vpack.c.b16 %v547, %v542
  %v643 = vpack.c.b16 %v548, %v543
  %v644 = vpack.c.b16 %v549, %v544
  %v645 = vpack.c.b16 %v550, %v545
  %v646 = vpack.c.b16 %v551, %v546
  %v647 = vpack.c.b16 %v557, %v552
  %v648 = vpack.c.b16 %v558, %v553
  %v649 = vpack.c.b16 %v559, %v554
  %v650 = vpack.c.b16 %v560, %v555
  %v651 = vpack.c.b16 %v561, %v556
  %v652 = vpack.c.b16 %v567, %v562
  %v653 = vpack.c.b16 %v568, %v563
  %v654 = vpack.c.b16 %v569, %v564
  %v655 = vpack.c.b16 %v570, %v565
  %v656 = vpack.c.b16 %v571, %v566
  %v657 = vpack.c.b16 %v577, %v572
  %v658 = vpack.c.b16 %v578, %v573
  %v659 = vpack.c.b16 %v579, %v574
  %v660 = vpack.c.b16 %v580, %v575
  %v661 = vpack.c.b16 %v581, %v576
  %742 = vmatprep.subr.bf16.mxu0 %v583
  %743 = vmatpush1.bf16.msra.mxu0 %v582
  %744 = vmatprep.subr.bf16.mxu0 %v588
  %745 = vmatpush1.bf16.msra.mxu0 %v587
  %746 = vmatprep.subr.bf16.mxu0 %v593
  %747 = vmatpush1.bf16.msra.mxu0 %v592
  %748 = vmatprep.subr.bf16.mxu0 %v598
  %749 = vmatpush1.bf16.msra.mxu0 %v597
  %750 = vmatprep.subr.bf16.mxu0 %v603
  %751 = vmatpush1.bf16.msra.mxu0 %v602
  %752 = vmatprep.subr.bf16.mxu0 %v608
  %753 = vmatpush1.bf16.msra.mxu0 %v607
  %754 = vmatprep.subr.bf16.mxu0 %v613
  %755 = vmatpush1.bf16.msra.mxu0 %v612
  %756 = vmatprep.subr.bf16.mxu0 %v618
  %757 = vmatpush1.bf16.msra.mxu0 %v617
  %758 = vmatprep.subr.bf16.mxu0 %v623
  %759 = vmatpush1.bf16.msra.mxu0 %v622
  %760 = vmatprep.subr.bf16.mxu0 %v628
  %761 = vmatpush1.bf16.msra.mxu0 %v627
  %762 = vmatprep.subr.bf16.mxu0 %v633
  %763 = vmatpush1.bf16.msra.mxu0 %v632
  %764 = vmatprep.subr.bf16.mxu0 %v638
  %765 = vmatpush1.bf16.msra.mxu0 %v637
  %766 = vmatprep.subr.bf16.mxu0 %v643
  %767 = vmatpush1.bf16.msra.mxu0 %v642
  %768 = vmatprep.subr.bf16.mxu0 %v648
  %769 = vmatpush1.bf16.msra.mxu0 %v647
  %770 = vmatprep.subr.bf16.mxu0 %v653
  %771 = vmatpush1.bf16.msra.mxu0 %v652
  %772 = vmatprep.subr.bf16.mxu0 %v658
  %773 = vmatpush1.bf16.msra.mxu0 %v657
  %774 = vmatprep.mubr.bf16.mxu0 %v229
  %775 = vmatmul.mubr.bf16.gmra.mrb[0].mxu0 %v228
  %v776 = vpop.f32.mrb[0].mxu0
  %v777 = vadd.f32 0.0, %v776
  %v778 = vpop.f32.mrb[0].mxu0
  %v779 = vadd.f32 0.0, %v778
  %v780 = vpop.f32.mrb[0].mxu0
  %v781 = vadd.f32 0.0, %v780
  %v782 = vpop.f32.mrb[0].mxu0
  %v783 = vadd.f32 0.0, %v782
  %784 = vdwg.mxu0
  %785 = vmatprep.subr.bf16.mxu0 %v585
  %786 = vmatpush1.bf16.msra.mxu0 %v584
  %787 = vmatprep.subr.bf16.mxu0 %v590
  %788 = vmatpush1.bf16.msra.mxu0 %v589
  %789 = vmatprep.subr.bf16.mxu0 %v595
  %790 = vmatpush1.bf16.msra.mxu0 %v594
  %791 = vmatprep.subr.bf16.mxu0 %v600
  %792 = vmatpush1.bf16.msra.mxu0 %v599
  %793 = vmatprep.subr.bf16.mxu0 %v605
  %794 = vmatpush1.bf16.msra.mxu0 %v604
  %795 = vmatprep.subr.bf16.mxu0 %v610
  %796 = vmatpush1.bf16.msra.mxu0 %v609
  %797 = vmatprep.subr.bf16.mxu0 %v615
  %798 = vmatpush1.bf16.msra.mxu0 %v614
  %799 = vmatprep.subr.bf16.mxu0 %v620
  %800 = vmatpush1.bf16.msra.mxu0 %v619
  %801 = vmatprep.subr.bf16.mxu0 %v625
  %802 = vmatpush1.bf16.msra.mxu0 %v624
  %803 = vmatprep.subr.bf16.mxu0 %v630
  %804 = vmatpush1.bf16.msra.mxu0 %v629
  %805 = vmatprep.subr.bf16.mxu0 %v635
  %806 = vmatpush1.bf16.msra.mxu0 %v634
  %807 = vmatprep.subr.bf16.mxu0 %v640
  %808 = vmatpush1.bf16.msra.mxu0 %v639
  %809 = vmatprep.subr.bf16.mxu0 %v645
  %810 = vmatpush1.bf16.msra.mxu0 %v644
  %811 = vmatprep.subr.bf16.mxu0 %v650
  %812 = vmatpush1.bf16.msra.mxu0 %v649
  %813 = vmatprep.subr.bf16.mxu0 %v655
  %814 = vmatpush1.bf16.msra.mxu0 %v654
  %815 = vmatprep.subr.bf16.mxu0 %v660
  %816 = vmatpush1.bf16.msra.mxu0 %v659
  %817 = vmatprep.mubr.bf16.mxu0 %v229
  %818 = vmatmul.mubr.bf16.gmra.mrb[0].mxu0 %v228
  %v819 = vpop.f32.mrb[0].mxu0
  %v820 = vadd.f32 0.0, %v819
  %v821 = vpop.f32.mrb[0].mxu0
  %v822 = vadd.f32 0.0, %v821
  %v823 = vpop.f32.mrb[0].mxu0
  %v824 = vadd.f32 0.0, %v823
  %v825 = vpop.f32.mrb[0].mxu0
  %v826 = vadd.f32 0.0, %v825
  %827 = vdwg.mxu0
  %828 = vmatprep.subr.bf16.mxu0 0
  %829 = vmatpush1.bf16.msra.mxu0 %v586
  %830 = vmatprep.subr.bf16.mxu0 0
  %831 = vmatpush1.bf16.msra.mxu0 %v591
  %832 = vmatprep.subr.bf16.mxu0 0
  %833 = vmatpush1.bf16.msra.mxu0 %v596
  %834 = vmatprep.subr.bf16.mxu0 0
  %835 = vmatpush1.bf16.msra.mxu0 %v601
  %836 = vmatprep.subr.bf16.mxu0 0
  %837 = vmatpush1.bf16.msra.mxu0 %v606
  %838 = vmatprep.subr.bf16.mxu0 0
  %839 = vmatpush1.bf16.msra.mxu0 %v611
  %840 = vmatprep.subr.bf16.mxu0 0
  %841 = vmatpush1.bf16.msra.mxu0 %v616
  %842 = vmatprep.subr.bf16.mxu0 0
  %843 = vmatpush1.bf16.msra.mxu0 %v621
  %844 = vmatprep.subr.bf16.mxu0 0
  %845 = vmatpush1.bf16.msra.mxu0 %v626
  %846 = vmatprep.subr.bf16.mxu0 0
  %847 = vmatpush1.bf16.msra.mxu0 %v631
  %848 = vmatprep.subr.bf16.mxu0 0
  %849 = vmatpush1.bf16.msra.mxu0 %v636
  %850 = vmatprep.subr.bf16.mxu0 0
  %851 = vmatpush1.bf16.msra.mxu0 %v641
  %852 = vmatprep.subr.bf16.mxu0 0
  %853 = vmatpush1.bf16.msra.mxu0 %v646
  %854 = vmatprep.subr.bf16.mxu0 0
  %855 = vmatpush1.bf16.msra.mxu0 %v651
  %856 = vmatprep.subr.bf16.mxu0 0
  %857 = vmatpush1.bf16.msra.mxu0 %v656
  %858 = vmatprep.subr.bf16.mxu0 0
  %859 = vmatpush1.bf16.msra.mxu0 %v661
  %860 = vmatprep.mubr.bf16.mxu0 %v229
  %861 = vmatmul.mubr.bf16.gmra.mrb[0].mxu0 %v228
  %v862 = vpop.f32.mrb[0].mxu0
  %v863 = vadd.f32 0.0, %v862
  %v864 = vpop.f32.mrb[0].mxu0
  %v865 = vpop.f32.mrb[0].mxu0
  %v866 = vadd.f32 0.0, %v865
  %v867 = vpop.f32.mrb[0].mxu0
  %868 = vdwg.mxu0
  %869 = vset.pattern.permute.xlu0 0
  %870 = vperm.xlu0 %869, %v15
  %v871 = vpop.permute.xlu0 %870
  %v873 = vlaneseq
  %v874 = vshrl.u32 %v873, 7
  %v875 = vsub.s32 0, %v874
  %v876 = vrot.slane %v777, %v875
  %v877 = vmul.f32 %v871, %v876
  %878 = vset.pattern.permute.xlu0 1
  %879 = vperm.xlu0 %878, %v15
  %v880 = vpop.permute.xlu0 %879
  %v882 = vlaneseq
  %v883 = vshrl.u32 %v882, 7
  %v884 = vsub.s32 1, %v883
  %v885 = vrot.slane %v777, %v884
  %v886 = vmul.f32 %v880, %v885
  %v887 = vadd.f32 %v877, %v886
  %888 = vset.pattern.permute.xlu0 2
  %889 = vperm.xlu0 %888, %v15
  %v890 = vpop.permute.xlu0 %889
  %v892 = vlaneseq
  %v893 = vshrl.u32 %v892, 7
  %v894 = vsub.s32 2, %v893
  %v895 = vrot.slane %v777, %v894
  %v896 = vmul.f32 %v890, %v895
  %v897 = vadd.f32 %v887, %v896
  %898 = vset.pattern.permute.xlu0 3
  %899 = vperm.xlu0 %898, %v15
  %v900 = vpop.permute.xlu0 %899
  %v902 = vlaneseq
  %v903 = vshrl.u32 %v902, 7
  %v904 = vsub.s32 3, %v903
  %v905 = vrot.slane %v777, %v904
  %v906 = vmul.f32 %v900, %v905
  %v907 = vadd.f32 %v897, %v906
  %908 = vset.pattern.permute.xlu0 4
  %909 = vperm.xlu0 %908, %v15
  %v910 = vpop.permute.xlu0 %909
  %v912 = vmul.f32 %v910, %v876
  %913 = vset.pattern.permute.xlu0 5
  %914 = vperm.xlu0 %913, %v15
  %v915 = vpop.permute.xlu0 %914
  %v917 = vmul.f32 %v915, %v885
  %v918 = vadd.f32 %v912, %v917
  %919 = vset.pattern.permute.xlu0 6
  %920 = vperm.xlu0 %919, %v15
  %v921 = vpop.permute.xlu0 %920
  %v923 = vmul.f32 %v921, %v895
  %v924 = vadd.f32 %v918, %v923
  %925 = vset.pattern.permute.xlu0 7
  %926 = vperm.xlu0 %925, %v15
  %v927 = vpop.permute.xlu0 %926
  %v929 = vmul.f32 %v927, %v905
  %v930 = vadd.f32 %v924, %v929
  %932 = vrot.lane.b32.xlu0 %v930, 64
  %v933 = vpop.permute.xlu0 %932
  %v935 = vadd.f32 %v907, %v933
  %936 = vset.pattern.permute.xlu0 8
  %937 = vperm.xlu0 %936, %v15
  %v938 = vpop.permute.xlu0 %937
  %v940 = vlaneseq
  %v941 = vshrl.u32 %v940, 7
  %v942 = vsub.s32 0, %v941
  %v943 = vrot.slane %v779, %v942
  %v944 = vmul.f32 %v938, %v943
  %945 = vset.pattern.permute.xlu0 9
  %946 = vperm.xlu0 %945, %v15
  %v947 = vpop.permute.xlu0 %946
  %v949 = vlaneseq
  %v950 = vshrl.u32 %v949, 7
  %v951 = vsub.s32 1, %v950
  %v952 = vrot.slane %v779, %v951
  %v953 = vmul.f32 %v947, %v952
  %v954 = vadd.f32 %v944, %v953
  %955 = vset.pattern.permute.xlu0 10
  %956 = vperm.xlu0 %955, %v15
  %v957 = vpop.permute.xlu0 %956
  %v959 = vlaneseq
  %v960 = vshrl.u32 %v959, 7
  %v961 = vsub.s32 2, %v960
  %v962 = vrot.slane %v779, %v961
  %v963 = vmul.f32 %v957, %v962
  %v964 = vadd.f32 %v954, %v963
  %965 = vset.pattern.permute.xlu0 11
  %966 = vperm.xlu0 %965, %v15
  %v967 = vpop.permute.xlu0 %966
  %v969 = vlaneseq
  %v970 = vshrl.u32 %v969, 7
  %v971 = vsub.s32 3, %v970
  %v972 = vrot.slane %v779, %v971
  %v973 = vmul.f32 %v967, %v972
  %v974 = vadd.f32 %v964, %v973
  %v975 = vadd.f32 %v935, %v974
  %976 = vset.pattern.permute.xlu0 12
  %977 = vperm.xlu0 %976, %v15
  %v978 = vpop.permute.xlu0 %977
  %v980 = vmul.f32 %v978, %v943
  %981 = vset.pattern.permute.xlu0 13
  %982 = vperm.xlu0 %981, %v15
  %v983 = vpop.permute.xlu0 %982
  %v985 = vmul.f32 %v983, %v952
  %v986 = vadd.f32 %v980, %v985
  %987 = vset.pattern.permute.xlu0 14
  %988 = vperm.xlu0 %987, %v15
  %v989 = vpop.permute.xlu0 %988
  %v991 = vmul.f32 %v989, %v962
  %v992 = vadd.f32 %v986, %v991
  %993 = vset.pattern.permute.xlu0 15
  %994 = vperm.xlu0 %993, %v15
  %v995 = vpop.permute.xlu0 %994
  %v997 = vmul.f32 %v995, %v972
  %v998 = vadd.f32 %v992, %v997
  %1000 = vrot.lane.b32.xlu0 %v998, 64
  %v1001 = vpop.permute.xlu0 %1000
  %v1003 = vadd.f32 %v975, %v1001
  %1004 = vset.pattern.permute.xlu0 16
  %1005 = vperm.xlu0 %1004, %v15
  %v1006 = vpop.permute.xlu0 %1005
  %v1008 = vlaneseq
  %v1009 = vshrl.u32 %v1008, 7
  %v1010 = vsub.s32 0, %v1009
  %v1011 = vrot.slane %v820, %v1010
  %v1012 = vmul.f32 %v1006, %v1011
  %1013 = vset.pattern.permute.xlu0 17
  %1014 = vperm.xlu0 %1013, %v15
  %v1015 = vpop.permute.xlu0 %1014
  %v1017 = vlaneseq
  %v1018 = vshrl.u32 %v1017, 7
  %v1019 = vsub.s32 1, %v1018
  %v1020 = vrot.slane %v820, %v1019
  %v1021 = vmul.f32 %v1015, %v1020
  %v1022 = vadd.f32 %v1012, %v1021
  %1023 = vset.pattern.permute.xlu0 18
  %1024 = vperm.xlu0 %1023, %v15
  %v1025 = vpop.permute.xlu0 %1024
  %v1027 = vlaneseq
  %v1028 = vshrl.u32 %v1027, 7
  %v1029 = vsub.s32 2, %v1028
  %v1030 = vrot.slane %v820, %v1029
  %v1031 = vmul.f32 %v1025, %v1030
  %v1032 = vadd.f32 %v1022, %v1031
  %1033 = vset.pattern.permute.xlu0 19
  %1034 = vperm.xlu0 %1033, %v15
  %v1035 = vpop.permute.xlu0 %1034
  %v1037 = vlaneseq
  %v1038 = vshrl.u32 %v1037, 7
  %v1039 = vsub.s32 3, %v1038
  %v1040 = vrot.slane %v820, %v1039
  %v1041 = vmul.f32 %v1035, %v1040
  %v1042 = vadd.f32 %v1032, %v1041
  %v1043 = vadd.f32 %v1003, %v1042
  %1044 = vset.pattern.permute.xlu0 20
  %1045 = vperm.xlu0 %1044, %v15
  %v1046 = vpop.permute.xlu0 %1045
  %v1048 = vmul.f32 %v1046, %v1011
  %1049 = vset.pattern.permute.xlu0 21
  %1050 = vperm.xlu0 %1049, %v15
  %v1051 = vpop.permute.xlu0 %1050
  %v1053 = vmul.f32 %v1051, %v1020
  %v1054 = vadd.f32 %v1048, %v1053
  %1055 = vset.pattern.permute.xlu0 22
  %1056 = vperm.xlu0 %1055, %v15
  %v1057 = vpop.permute.xlu0 %1056
  %v1059 = vmul.f32 %v1057, %v1030
  %v1060 = vadd.f32 %v1054, %v1059
  %1061 = vset.pattern.permute.xlu0 23
  %1062 = vperm.xlu0 %1061, %v15
  %v1063 = vpop.permute.xlu0 %1062
  %v1065 = vmul.f32 %v1063, %v1040
  %v1066 = vadd.f32 %v1060, %v1065
  %1068 = vrot.lane.b32.xlu0 %v1066, 64
  %v1069 = vpop.permute.xlu0 %1068
  %v1071 = vadd.f32 %v1043, %v1069
  %1072 = vset.pattern.permute.xlu0 24
  %1073 = vperm.xlu0 %1072, %v15
  %v1074 = vpop.permute.xlu0 %1073
  %v1076 = vlaneseq
  %v1077 = vshrl.u32 %v1076, 7
  %v1078 = vsub.s32 0, %v1077
  %v1079 = vrot.slane %v822, %v1078
  %v1080 = vmul.f32 %v1074, %v1079
  %1081 = vset.pattern.permute.xlu0 25
  %1082 = vperm.xlu0 %1081, %v15
  %v1083 = vpop.permute.xlu0 %1082
  %v1085 = vlaneseq
  %v1086 = vshrl.u32 %v1085, 7
  %v1087 = vsub.s32 1, %v1086
  %v1088 = vrot.slane %v822, %v1087
  %v1089 = vmul.f32 %v1083, %v1088
  %v1090 = vadd.f32 %v1080, %v1089
  %1091 = vset.pattern.permute.xlu0 26
  %1092 = vperm.xlu0 %1091, %v15
  %v1093 = vpop.permute.xlu0 %1092
  %v1095 = vlaneseq
  %v1096 = vshrl.u32 %v1095, 7
  %v1097 = vsub.s32 2, %v1096
  %v1098 = vrot.slane %v822, %v1097
  %v1099 = vmul.f32 %v1093, %v1098
  %v1100 = vadd.f32 %v1090, %v1099
  %1101 = vset.pattern.permute.xlu0 27
  %1102 = vperm.xlu0 %1101, %v15
  %v1103 = vpop.permute.xlu0 %1102
  %v1105 = vlaneseq
  %v1106 = vshrl.u32 %v1105, 7
  %v1107 = vsub.s32 3, %v1106
  %v1108 = vrot.slane %v822, %v1107
  %v1109 = vmul.f32 %v1103, %v1108
  %v1110 = vadd.f32 %v1100, %v1109
  %v1111 = vadd.f32 %v1071, %v1110
  %1112 = vset.pattern.permute.xlu0 28
  %1113 = vperm.xlu0 %1112, %v15
  %v1114 = vpop.permute.xlu0 %1113
  %v1116 = vmul.f32 %v1114, %v1079
  %1117 = vset.pattern.permute.xlu0 29
  %1118 = vperm.xlu0 %1117, %v15
  %v1119 = vpop.permute.xlu0 %1118
  %v1121 = vmul.f32 %v1119, %v1088
  %v1122 = vadd.f32 %v1116, %v1121
  %1123 = vset.pattern.permute.xlu0 30
  %1124 = vperm.xlu0 %1123, %v15
  %v1125 = vpop.permute.xlu0 %1124
  %v1127 = vmul.f32 %v1125, %v1098
  %v1128 = vadd.f32 %v1122, %v1127
  %1129 = vset.pattern.permute.xlu0 31
  %1130 = vperm.xlu0 %1129, %v15
  %v1131 = vpop.permute.xlu0 %1130
  %v1133 = vmul.f32 %v1131, %v1108
  %v1134 = vadd.f32 %v1128, %v1133
  %1136 = vrot.lane.b32.xlu0 %v1134, 64
  %v1137 = vpop.permute.xlu0 %1136
  %v1139 = vadd.f32 %v1111, %v1137
  %1140 = vset.pattern.permute.xlu0 32
  %1141 = vperm.xlu0 %1140, %v15
  %v1142 = vpop.permute.xlu0 %1141
  %v1144 = vlaneseq
  %v1145 = vshrl.u32 %v1144, 7
  %v1146 = vsub.s32 0, %v1145
  %v1147 = vrot.slane %v863, %v1146
  %v1148 = vmul.f32 %v1142, %v1147
  %1149 = vset.pattern.permute.xlu0 33
  %1150 = vperm.xlu0 %1149, %v15
  %v1151 = vpop.permute.xlu0 %1150
  %v1153 = vlaneseq
  %v1154 = vshrl.u32 %v1153, 7
  %v1155 = vsub.s32 1, %v1154
  %v1156 = vrot.slane %v863, %v1155
  %v1157 = vmul.f32 %v1151, %v1156
  %v1158 = vadd.f32 %v1148, %v1157
  %1159 = vset.pattern.permute.xlu0 34
  %1160 = vperm.xlu0 %1159, %v15
  %v1161 = vpop.permute.xlu0 %1160
  %v1163 = vlaneseq
  %v1164 = vshrl.u32 %v1163, 7
  %v1165 = vsub.s32 2, %v1164
  %v1166 = vrot.slane %v863, %v1165
  %v1167 = vmul.f32 %v1161, %v1166
  %v1168 = vadd.f32 %v1158, %v1167
  %1169 = vset.pattern.permute.xlu0 35
  %1170 = vperm.xlu0 %1169, %v15
  %v1171 = vpop.permute.xlu0 %1170
  %v1173 = vlaneseq
  %v1174 = vshrl.u32 %v1173, 7
  %v1175 = vsub.s32 3, %v1174
  %v1176 = vrot.slane %v863, %v1175
  %v1177 = vmul.f32 %v1171, %v1176
  %v1178 = vadd.f32 %v1168, %v1177
  %v1179 = vadd.f32 %v1139, %v1178
  %vm1180 = vcmask 519168
  %v1181 = vsel %vm1180, %v1179, 0.0
  %1182 = vadd.xlane.f32.xlu0 %v1181
  %v1183 = vpop.xlane.xlu0 %1182
  %v1184 = vmul.f32 %v1179, %v1179
  %v1185 = vsel %vm1180, %v1184, 0.0
  %1186 = vadd.xlane.f32.xlu0 %v1185
  %v1187 = vpop.xlane.xlu0 %1186
  %v1188 = vmul.f32 %v1183, 0.015625
  %v1189 = vmul.f32 %v1187, 0.015625
  %v1190 = vmul.f32 %v1188, %v1188
  %v1191 = vsub.f32 %v1189, %v1190
  %v1192 = vmax.f32 %v1191, 0.0
  %v1193 = vadd.f32 %v1192, 1e-05
  %v1194 = vrsqrt.pop %v1193
  %v1195 = vmul.f32 %v1194, %v15
  %v1196 = vmul.f32 %v1188, %v1195
  %1198 = vrot.lane.b32.xlu0 %v1196, 1
  %v1199 = vpop.permute.xlu0 %1198
  %v1201 = vsub.f32 %v15, %v1199
  %1203 = vset.pattern.permute.xlu0 50
  %1204 = vperm.xlu0 %1203, %v1195
  %v1205 = vpop.permute.xlu0 %1204
  %v1207 = vmul.f32 %v1179, %v1205
  %1209 = vset.pattern.permute.xlu0 51
  %1210 = vperm.xlu0 %1209, %v1201
  %v1211 = vpop.permute.xlu0 %1210
  %v1213 = vadd.f32 %v1207, %v1211
  %v1214 = vmul.f32 %v1213, 0.01
  %v1215 = vmax.f32 %v1213, %v1214
  %1217 = vrot.lane.b32.xlu0 %v820, 64
  %v1218 = vpop.permute.xlu0 %1217
  %v1220 = vadd.f32 %v820, %v1218
  %1222 = vrot.lane.b32.xlu0 %v822, 64
  %v1223 = vpop.permute.xlu0 %1222
  %v1225 = vadd.f32 %v1220, %v1223
  %v1226 = vadd.f32 %v1225, %v863
  %v1227 = vmul.f32 %v1226, 0.25
  %1228 = vset.pattern.permute.xlu0 44
  %1229 = vperm.xlu0 %1228, %v15
  %v1230 = vpop.permute.xlu0 %1229
  %v1232 = vlaneseq
  %v1233 = vshrl.u32 %v1232, 7
  %v1234 = vsub.s32 4, %v1233
  %v1235 = vrot.slane %v1227, %v1234
  %v1236 = vmul.f32 %v1230, %v1235
  %1237 = vset.pattern.permute.xlu0 45
  %1238 = vperm.xlu0 %1237, %v15
  %v1239 = vpop.permute.xlu0 %1238
  %v1241 = vlaneseq
  %v1242 = vshrl.u32 %v1241, 7
  %v1243 = vsub.s32 5, %v1242
  %v1244 = vrot.slane %v1227, %v1243
  %v1245 = vmul.f32 %v1239, %v1244
  %v1246 = vadd.f32 %v1236, %v1245
  %1247 = vset.pattern.permute.xlu0 46
  %1248 = vperm.xlu0 %1247, %v15
  %v1249 = vpop.permute.xlu0 %1248
  %v1251 = vlaneseq
  %v1252 = vshrl.u32 %v1251, 7
  %v1253 = vsub.s32 6, %v1252
  %v1254 = vrot.slane %v1227, %v1253
  %v1255 = vmul.f32 %v1249, %v1254
  %v1256 = vadd.f32 %v1246, %v1255
  %1257 = vset.pattern.permute.xlu0 47
  %1258 = vperm.xlu0 %1257, %v15
  %v1259 = vpop.permute.xlu0 %1258
  %v1261 = vlaneseq
  %v1262 = vshrl.u32 %v1261, 7
  %v1263 = vsub.s32 7, %v1262
  %v1264 = vrot.slane %v1227, %v1263
  %v1265 = vmul.f32 %v1259, %v1264
  %v1266 = vadd.f32 %v1256, %v1265
  %vm1267 = vcmask 523264
  %v1268 = vsel %vm1267, %v1266, 0.0
  %1269 = vadd.xlane.f32.xlu0 %v1268
  %v1270 = vpop.xlane.xlu0 %1269
  %v1271 = vmul.f32 %v1266, %v1266
  %v1272 = vsel %vm1267, %v1271, 0.0
  %1273 = vadd.xlane.f32.xlu0 %v1272
  %v1274 = vpop.xlane.xlu0 %1273
  %v1275 = vmul.f32 %v1270, 0.015625
  %v1276 = vmul.f32 %v1274, 0.015625
  %v1277 = vmul.f32 %v1275, %v1275
  %v1278 = vsub.f32 %v1276, %v1277
  %v1279 = vmax.f32 %v1278, 0.0
  %v1280 = vadd.f32 %v1279, 1e-05
  %v1281 = vrsqrt.pop %v1280
  %v1282 = vmul.f32 %v1281, %v15
  %v1283 = vmul.f32 %v1275, %v1282
  %1285 = vrot.lane.b32.xlu0 %v1283, 1
  %v1286 = vpop.permute.xlu0 %1285
  %v1288 = vsub.f32 %v15, %v1286
  %1290 = vset.pattern.permute.xlu0 54
  %1291 = vperm.xlu0 %1290, %v1282
  %v1292 = vpop.permute.xlu0 %1291
  %v1294 = vmul.f32 %v1266, %v1292
  %1296 = vset.pattern.permute.xlu0 55
  %1297 = vperm.xlu0 %1296, %v1288
  %v1298 = vpop.permute.xlu0 %1297
  %v1300 = vadd.f32 %v1294, %v1298
  %1301 = vset.pattern.permute.xlu0 40
  %1302 = vperm.xlu0 %1301, %v15
  %v1303 = vpop.permute.xlu0 %1302
  %v1305 = vlaneseq
  %v1306 = vshrl.u32 %v1305, 7
  %v1307 = vsub.s32 0, %v1306
  %v1308 = vrot.slane %v1215, %v1307
  %v1309 = vmul.f32 %v1303, %v1308
  %1310 = vset.pattern.permute.xlu0 41
  %1311 = vperm.xlu0 %1310, %v15
  %v1312 = vpop.permute.xlu0 %1311
  %v1314 = vlaneseq
  %v1315 = vshrl.u32 %v1314, 7
  %v1316 = vsub.s32 1, %v1315
  %v1317 = vrot.slane %v1215, %v1316
  %v1318 = vmul.f32 %v1312, %v1317
  %v1319 = vadd.f32 %v1309, %v1318
  %1320 = vset.pattern.permute.xlu0 42
  %1321 = vperm.xlu0 %1320, %v15
  %v1322 = vpop.permute.xlu0 %1321
  %v1324 = vlaneseq
  %v1325 = vshrl.u32 %v1324, 7
  %v1326 = vsub.s32 2, %v1325
  %v1327 = vrot.slane %v1215, %v1326
  %v1328 = vmul.f32 %v1322, %v1327
  %v1329 = vadd.f32 %v1319, %v1328
  %1330 = vset.pattern.permute.xlu0 43
  %1331 = vperm.xlu0 %1330, %v15
  %v1332 = vpop.permute.xlu0 %1331
  %v1334 = vlaneseq
  %v1335 = vshrl.u32 %v1334, 7
  %v1336 = vsub.s32 3, %v1335
  %v1337 = vrot.slane %v1215, %v1336
  %v1338 = vmul.f32 %v1332, %v1337
  %v1339 = vadd.f32 %v1329, %v1338
  %v1340 = vsel %vm1267, %v1339, 0.0
  %1341 = vadd.xlane.f32.xlu0 %v1340
  %v1342 = vpop.xlane.xlu0 %1341
  %v1343 = vmul.f32 %v1339, %v1339
  %v1344 = vsel %vm1267, %v1343, 0.0
  %1345 = vadd.xlane.f32.xlu0 %v1344
  %v1346 = vpop.xlane.xlu0 %1345
  %v1347 = vmul.f32 %v1342, 0.015625
  %v1348 = vmul.f32 %v1346, 0.015625
  %v1349 = vmul.f32 %v1347, %v1347
  %v1350 = vsub.f32 %v1348, %v1349
  %v1351 = vmax.f32 %v1350, 0.0
  %v1352 = vadd.f32 %v1351, 1e-05
  %v1353 = vrsqrt.pop %v1352
  %v1354 = vmul.f32 %v1353, %v15
  %v1355 = vmul.f32 %v1347, %v1354
  %1357 = vrot.lane.b32.xlu0 %v1355, 1
  %v1358 = vpop.permute.xlu0 %1357
  %v1360 = vsub.f32 %v15, %v1358
  %1362 = vset.pattern.permute.xlu0 52
  %1363 = vperm.xlu0 %1362, %v1354
  %v1364 = vpop.permute.xlu0 %1363
  %v1366 = vmul.f32 %v1339, %v1364
  %1368 = vset.pattern.permute.xlu0 53
  %1369 = vperm.xlu0 %1368, %v1360
  %v1370 = vpop.permute.xlu0 %1369
  %v1372 = vadd.f32 %v1366, %v1370
  %v1373 = vadd.f32 %v1372, %v1300
  %v1374 = vmul.f32 %v1373, 0.01
  %v1375 = vmax.f32 %v1373, %v1374
  %1376 = vst.msk [vmem:[%s3] sm:$0xff] %vm1267, %v1375
  %v1377 = vlaneseq
  %v1378 = vshrl.u32 %v1377, 7
  %v1379 = vsub.s32 0, %v1378
  %v1380 = vrot.slane %v781, %v1379
  %v1381 = vmul.f32 %v871, %v1380
  %v1382 = vlaneseq
  %v1383 = vshrl.u32 %v1382, 7
  %v1384 = vsub.s32 1, %v1383
  %v1385 = vrot.slane %v781, %v1384
  %v1386 = vmul.f32 %v880, %v1385
  %v1387 = vadd.f32 %v1381, %v1386
  %v1388 = vlaneseq
  %v1389 = vshrl.u32 %v1388, 7
  %v1390 = vsub.s32 2, %v1389
  %v1391 = vrot.slane %v781, %v1390
  %v1392 = vmul.f32 %v890, %v1391
  %v1393 = vadd.f32 %v1387, %v1392
  %v1394 = vlaneseq
  %v1395 = vshrl.u32 %v1394, 7
  %v1396 = vsub.s32 3, %v1395
  %v1397 = vrot.slane %v781, %v1396
  %v1398 = vmul.f32 %v900, %v1397
  %v1399 = vadd.f32 %v1393, %v1398
  %v1400 = vmul.f32 %v910, %v1380
  %v1401 = vmul.f32 %v915, %v1385
  %v1402 = vadd.f32 %v1400, %v1401
  %v1403 = vmul.f32 %v921, %v1391
  %v1404 = vadd.f32 %v1402, %v1403
  %v1405 = vmul.f32 %v927, %v1397
  %v1406 = vadd.f32 %v1404, %v1405
  %1408 = vrot.lane.b32.xlu0 %v1406, 64
  %v1409 = vpop.permute.xlu0 %1408
  %v1411 = vadd.f32 %v1399, %v1409
  %v1412 = vlaneseq
  %v1413 = vshrl.u32 %v1412, 7
  %v1414 = vsub.s32 0, %v1413
  %v1415 = vrot.slane %v783, %v1414
  %v1416 = vmul.f32 %v938, %v1415
  %v1417 = vlaneseq
  %v1418 = vshrl.u32 %v1417, 7
  %v1419 = vsub.s32 1, %v1418
  %v1420 = vrot.slane %v783, %v1419
  %v1421 = vmul.f32 %v947, %v1420
  %v1422 = vadd.f32 %v1416, %v1421
  %v1423 = vlaneseq
  %v1424 = vshrl.u32 %v1423, 7
  %v1425 = vsub.s32 2, %v1424
  %v1426 = vrot.slane %v783, %v1425
  %v1427 = vmul.f32 %v957, %v1426
  %v1428 = vadd.f32 %v1422, %v1427
  %v1429 = vlaneseq
  %v1430 = vshrl.u32 %v1429, 7
  %v1431 = vsub.s32 3, %v1430
  %v1432 = vrot.slane %v783, %v1431
  %v1433 = vmul.f32 %v967, %v1432
  %v1434 = vadd.f32 %v1428, %v1433
  %v1435 = vadd.f32 %v1411, %v1434
  %v1436 = vmul.f32 %v978, %v1415
  %v1437 = vmul.f32 %v983, %v1420
  %v1438 = vadd.f32 %v1436, %v1437
  %v1439 = vmul.f32 %v989, %v1426
  %v1440 = vadd.f32 %v1438, %v1439
  %v1441 = vmul.f32 %v995, %v1432
  %v1442 = vadd.f32 %v1440, %v1441
  %1444 = vrot.lane.b32.xlu0 %v1442, 64
  %v1445 = vpop.permute.xlu0 %1444
  %v1447 = vadd.f32 %v1435, %v1445
  %v1448 = vlaneseq
  %v1449 = vshrl.u32 %v1448, 7
  %v1450 = vsub.s32 0, %v1449
  %v1451 = vrot.slane %v824, %v1450
  %v1452 = vmul.f32 %v1006, %v1451
  %v1453 = vlaneseq
  %v1454 = vshrl.u32 %v1453, 7
  %v1455 = vsub.s32 1, %v1454
  %v1456 = vrot.slane %v824, %v1455
  %v1457 = vmul.f32 %v1015, %v1456
  %v1458 = vadd.f32 %v1452, %v1457
  %v1459 = vlaneseq
  %v1460 = vshrl.u32 %v1459, 7
  %v1461 = vsub.s32 2, %v1460
  %v1462 = vrot.slane %v824, %v1461
  %v1463 = vmul.f32 %v1025, %v1462
  %v1464 = vadd.f32 %v1458, %v1463
  %v1465 = vlaneseq
  %v1466 = vshrl.u32 %v1465, 7
  %v1467 = vsub.s32 3, %v1466
  %v1468 = vrot.slane %v824, %v1467
  %v1469 = vmul.f32 %v1035, %v1468
  %v1470 = vadd.f32 %v1464, %v1469
  %v1471 = vadd.f32 %v1447, %v1470
  %v1472 = vmul.f32 %v1046, %v1451
  %v1473 = vmul.f32 %v1051, %v1456
  %v1474 = vadd.f32 %v1472, %v1473
  %v1475 = vmul.f32 %v1057, %v1462
  %v1476 = vadd.f32 %v1474, %v1475
  %v1477 = vmul.f32 %v1063, %v1468
  %v1478 = vadd.f32 %v1476, %v1477
  %1480 = vrot.lane.b32.xlu0 %v1478, 64
  %v1481 = vpop.permute.xlu0 %1480
  %v1483 = vadd.f32 %v1471, %v1481
  %v1484 = vlaneseq
  %v1485 = vshrl.u32 %v1484, 7
  %v1486 = vsub.s32 0, %v1485
  %v1487 = vrot.slane %v826, %v1486
  %v1488 = vmul.f32 %v1074, %v1487
  %v1489 = vlaneseq
  %v1490 = vshrl.u32 %v1489, 7
  %v1491 = vsub.s32 1, %v1490
  %v1492 = vrot.slane %v826, %v1491
  %v1493 = vmul.f32 %v1083, %v1492
  %v1494 = vadd.f32 %v1488, %v1493
  %v1495 = vlaneseq
  %v1496 = vshrl.u32 %v1495, 7
  %v1497 = vsub.s32 2, %v1496
  %v1498 = vrot.slane %v826, %v1497
  %v1499 = vmul.f32 %v1093, %v1498
  %v1500 = vadd.f32 %v1494, %v1499
  %v1501 = vlaneseq
  %v1502 = vshrl.u32 %v1501, 7
  %v1503 = vsub.s32 3, %v1502
  %v1504 = vrot.slane %v826, %v1503
  %v1505 = vmul.f32 %v1103, %v1504
  %v1506 = vadd.f32 %v1500, %v1505
  %v1507 = vadd.f32 %v1483, %v1506
  %v1508 = vmul.f32 %v1114, %v1487
  %v1509 = vmul.f32 %v1119, %v1492
  %v1510 = vadd.f32 %v1508, %v1509
  %v1511 = vmul.f32 %v1125, %v1498
  %v1512 = vadd.f32 %v1510, %v1511
  %v1513 = vmul.f32 %v1131, %v1504
  %v1514 = vadd.f32 %v1512, %v1513
  %1516 = vrot.lane.b32.xlu0 %v1514, 64
  %v1517 = vpop.permute.xlu0 %1516
  %v1519 = vadd.f32 %v1507, %v1517
  %v1520 = vlaneseq
  %v1521 = vshrl.u32 %v1520, 7
  %v1522 = vsub.s32 0, %v1521
  %v1523 = vrot.slane %v866, %v1522
  %v1524 = vmul.f32 %v1142, %v1523
  %v1525 = vlaneseq
  %v1526 = vshrl.u32 %v1525, 7
  %v1527 = vsub.s32 1, %v1526
  %v1528 = vrot.slane %v866, %v1527
  %v1529 = vmul.f32 %v1151, %v1528
  %v1530 = vadd.f32 %v1524, %v1529
  %v1531 = vlaneseq
  %v1532 = vshrl.u32 %v1531, 7
  %v1533 = vsub.s32 2, %v1532
  %v1534 = vrot.slane %v866, %v1533
  %v1535 = vmul.f32 %v1161, %v1534
  %v1536 = vadd.f32 %v1530, %v1535
  %v1537 = vlaneseq
  %v1538 = vshrl.u32 %v1537, 7
  %v1539 = vsub.s32 3, %v1538
  %v1540 = vrot.slane %v866, %v1539
  %v1541 = vmul.f32 %v1171, %v1540
  %v1542 = vadd.f32 %v1536, %v1541
  %v1543 = vadd.f32 %v1519, %v1542
  %v1544 = vsel %vm1180, %v1543, 0.0
  %1545 = vadd.xlane.f32.xlu0 %v1544
  %v1546 = vpop.xlane.xlu0 %1545
  %v1547 = vmul.f32 %v1543, %v1543
  %v1548 = vsel %vm1180, %v1547, 0.0
  %1549 = vadd.xlane.f32.xlu0 %v1548
  %v1550 = vpop.xlane.xlu0 %1549
  %v1551 = vmul.f32 %v1546, 0.015625
  %v1552 = vmul.f32 %v1550, 0.015625
  %v1553 = vmul.f32 %v1551, %v1551
  %v1554 = vsub.f32 %v1552, %v1553
  %v1555 = vmax.f32 %v1554, 0.0
  %v1556 = vadd.f32 %v1555, 1e-05
  %v1557 = vrsqrt.pop %v1556
  %v1558 = vmul.f32 %v1557, %v15
  %v1559 = vmul.f32 %v1551, %v1558
  %1561 = vrot.lane.b32.xlu0 %v1559, 1
  %v1562 = vpop.permute.xlu0 %1561
  %v1564 = vsub.f32 %v15, %v1562
  %1566 = vset.pattern.permute.xlu0 50
  %1567 = vperm.xlu0 %1566, %v1558
  %v1568 = vpop.permute.xlu0 %1567
  %v1570 = vmul.f32 %v1543, %v1568
  %1572 = vset.pattern.permute.xlu0 51
  %1573 = vperm.xlu0 %1572, %v1564
  %v1574 = vpop.permute.xlu0 %1573
  %v1576 = vadd.f32 %v1570, %v1574
  %v1577 = vmul.f32 %v1576, 0.01
  %v1578 = vmax.f32 %v1576, %v1577
  %1580 = vrot.lane.b32.xlu0 %v824, 64
  %v1581 = vpop.permute.xlu0 %1580
  %v1583 = vadd.f32 %v824, %v1581
  %1585 = vrot.lane.b32.xlu0 %v826, 64
  %v1586 = vpop.permute.xlu0 %1585
  %v1588 = vadd.f32 %v1583, %v1586
  %v1589 = vadd.f32 %v1588, %v866
  %v1590 = vmul.f32 %v1589, 0.25
  %v1591 = vlaneseq
  %v1592 = vshrl.u32 %v1591, 7
  %v1593 = vsub.s32 4, %v1592
  %v1594 = vrot.slane %v1590, %v1593
  %v1595 = vmul.f32 %v1230, %v1594
  %v1596 = vlaneseq
  %v1597 = vshrl.u32 %v1596, 7
  %v1598 = vsub.s32 5, %v1597
  %v1599 = vrot.slane %v1590, %v1598
  %v1600 = vmul.f32 %v1239, %v1599
  %v1601 = vadd.f32 %v1595, %v1600
  %v1602 = vlaneseq
  %v1603 = vshrl.u32 %v1602, 7
  %v1604 = vsub.s32 6, %v1603
  %v1605 = vrot.slane %v1590, %v1604
  %v1606 = vmul.f32 %v1249, %v1605
  %v1607 = vadd.f32 %v1601, %v1606
  %v1608 = vlaneseq
  %v1609 = vshrl.u32 %v1608, 7
  %v1610 = vsub.s32 7, %v1609
  %v1611 = vrot.slane %v1590, %v1610
  %v1612 = vmul.f32 %v1259, %v1611
  %v1613 = vadd.f32 %v1607, %v1612
  %v1614 = vsel %vm1267, %v1613, 0.0
  %1615 = vadd.xlane.f32.xlu0 %v1614
  %v1616 = vpop.xlane.xlu0 %1615
  %v1617 = vmul.f32 %v1613, %v1613
  %v1618 = vsel %vm1267, %v1617, 0.0
  %1619 = vadd.xlane.f32.xlu0 %v1618
  %v1620 = vpop.xlane.xlu0 %1619
  %v1621 = vmul.f32 %v1616, 0.015625
  %v1622 = vmul.f32 %v1620, 0.015625
  %v1623 = vmul.f32 %v1621, %v1621
  %v1624 = vsub.f32 %v1622, %v1623
  %v1625 = vmax.f32 %v1624, 0.0
  %v1626 = vadd.f32 %v1625, 1e-05
  %v1627 = vrsqrt.pop %v1626
  %v1628 = vmul.f32 %v1627, %v15
  %v1629 = vmul.f32 %v1621, %v1628
  %1631 = vrot.lane.b32.xlu0 %v1629, 1
  %v1632 = vpop.permute.xlu0 %1631
  %v1634 = vsub.f32 %v15, %v1632
  %1636 = vset.pattern.permute.xlu0 54
  %1637 = vperm.xlu0 %1636, %v1628
  %v1638 = vpop.permute.xlu0 %1637
  %v1640 = vmul.f32 %v1613, %v1638
  %1642 = vset.pattern.permute.xlu0 55
  %1643 = vperm.xlu0 %1642, %v1634
  %v1644 = vpop.permute.xlu0 %1643
  %v1646 = vadd.f32 %v1640, %v1644
  %v1647 = vlaneseq
  %v1648 = vshrl.u32 %v1647, 7
  %v1649 = vsub.s32 0, %v1648
  %v1650 = vrot.slane %v1578, %v1649
  %v1651 = vmul.f32 %v1303, %v1650
  %v1652 = vlaneseq
  %v1653 = vshrl.u32 %v1652, 7
  %v1654 = vsub.s32 1, %v1653
  %v1655 = vrot.slane %v1578, %v1654
  %v1656 = vmul.f32 %v1312, %v1655
  %v1657 = vadd.f32 %v1651, %v1656
  %v1658 = vlaneseq
  %v1659 = vshrl.u32 %v1658, 7
  %v1660 = vsub.s32 2, %v1659
  %v1661 = vrot.slane %v1578, %v1660
  %v1662 = vmul.f32 %v1322, %v1661
  %v1663 = vadd.f32 %v1657, %v1662
  %v1664 = vlaneseq
  %v1665 = vshrl.u32 %v1664, 7
  %v1666 = vsub.s32 3, %v1665
  %v1667 = vrot.slane %v1578, %v1666
  %v1668 = vmul.f32 %v1332, %v1667
  %v1669 = vadd.f32 %v1663, %v1668
  %v1670 = vsel %vm1267, %v1669, 0.0
  %1671 = vadd.xlane.f32.xlu0 %v1670
  %v1672 = vpop.xlane.xlu0 %1671
  %v1673 = vmul.f32 %v1669, %v1669
  %v1674 = vsel %vm1267, %v1673, 0.0
  %1675 = vadd.xlane.f32.xlu0 %v1674
  %v1676 = vpop.xlane.xlu0 %1675
  %v1677 = vmul.f32 %v1672, 0.015625
  %v1678 = vmul.f32 %v1676, 0.015625
  %v1679 = vmul.f32 %v1677, %v1677
  %v1680 = vsub.f32 %v1678, %v1679
  %v1681 = vmax.f32 %v1680, 0.0
  %v1682 = vadd.f32 %v1681, 1e-05
  %v1683 = vrsqrt.pop %v1682
  %v1684 = vmul.f32 %v1683, %v15
  %v1685 = vmul.f32 %v1677, %v1684
  %1687 = vrot.lane.b32.xlu0 %v1685, 1
  %v1688 = vpop.permute.xlu0 %1687
  %v1690 = vsub.f32 %v15, %v1688
  %1692 = vset.pattern.permute.xlu0 52
  %1693 = vperm.xlu0 %1692, %v1684
  %v1694 = vpop.permute.xlu0 %1693
  %v1696 = vmul.f32 %v1669, %v1694
  %1698 = vset.pattern.permute.xlu0 53
  %1699 = vperm.xlu0 %1698, %v1690
  %v1700 = vpop.permute.xlu0 %1699
  %v1702 = vadd.f32 %v1696, %v1700
  %v1703 = vadd.f32 %v1702, %v1646
  %v1704 = vmul.f32 %v1703, 0.01
  %v1705 = vmax.f32 %v1703, %v1704
  %1706 = vst.msk [vmem:[%s3 + $0x8] sm:$0xff] %vm1267, %v1705
  // Predicated region
  $region14: #{bottleneck_d_forward.1} parent=0 // pred_check
    _
  $region15: #{bottleneck_d_forward.1} parent=0 // pred_check_branch
    %1708 = sbr.rel (0) target = $region17
  $region16: #{bottleneck_d_forward.1} parent=0 // pred_region
    _
  $region17: #{bottleneck_d_forward.1} parent=0 // pred_fallthru
    _
  // Predicated region
  $region18: #{bottleneck_d_forward.1} parent=0 // pred_check
    _
  $region19: #{bottleneck_d_forward.1} parent=0 // pred_check_branch
    %1710 = sbr.rel (0) target = $region21
  $region20: #{bottleneck_d_forward.1} parent=0 // pred_region
    _
  $region21: #{bottleneck_d_forward.1} parent=0 // pred_fallthru
    _

</llo_original>
